<compile_context>
chip_gen: v5e
topology: v5e:2x2
jax: 0.10.0
libtpu: 0.0.40
codegen_flags: <defaults>
</compile_context>

<pallas_src>
import functools

import jax
import jax.numpy as jnp
from jax.experimental import pallas as pl
from jax.experimental.pallas import tpu as pltpu

BN_EPS = 1e-3

_VMEM_SPEC = pl.BlockSpec(memory_space=pltpu.MemorySpace.VMEM)


def _tile(m, target):
    """Largest tile <= target that divides m and is a multiple of 8 (else full m)."""
    if m <= target:
        return m
    for t in range(target, 7, -8):
        if t % 8 == 0 and m % t == 0:
            return t
    return m


# ----------------------- 1x1 conv as M-tiled matmul (MXU) -----------------------

def _mm_bn_act_kernel(x_ref, w_ref, s_ref, b_ref, o_ref, *, act):
    y = jnp.dot(x_ref[...], w_ref[...], preferred_element_type=jnp.float32)
    y = y * s_ref[...] + b_ref[...]
    if act == "swish":
        y = y * jax.nn.sigmoid(y)
    o_ref[...] = y.astype(o_ref.dtype)


def matmul_bn_act(x, w, scale, bias, act="none", out_dtype=jnp.bfloat16, tm_target=512):
    M, K = x.shape
    _, N = w.shape
    tm = _tile(M, tm_target)
    kern = functools.partial(_mm_bn_act_kernel, act=act)
    return pl.pallas_call(
        kern,
        out_shape=jax.ShapeDtypeStruct((M, N), out_dtype),
        grid=(M // tm,),
        in_specs=[
            pl.BlockSpec((tm, K), lambda i: (i, 0)),
            pl.BlockSpec((K, N), lambda i: (0, 0)),      # resident weight
            pl.BlockSpec((1, N), lambda i: (0, 0)),
            pl.BlockSpec((1, N), lambda i: (0, 0)),
        ],
        out_specs=pl.BlockSpec((tm, N), lambda i: (i, 0)),
        compiler_params=pltpu.CompilerParams(dimension_semantics=("parallel",)),
    )(x, w, scale.reshape(1, N), bias.reshape(1, N))


# ---------------- depthwise conv, stride 1: fused in-kernel im2col ---------------

def _dw_s1_kernel(x_ref, w_ref, s_ref, b_ref, o_ref, m_ref, *, k, oh, ow):
    x = x_ref[0].astype(jnp.float32)                  # (oh+k-1, ow+k-1, C)
    w = w_ref[...]                                    # (k*k, C) f32
    acc = None
    for ky in range(k):
        for kx in range(k):
            tap = x[ky:ky + oh, kx:kx + ow, :] * w[ky * k + kx]
            acc = tap if acc is None else acc + tap
    y = acc * s_ref[0] + b_ref[0]
    y = y * jax.nn.sigmoid(y)                         # swish
    o_ref[0] = y.astype(o_ref.dtype)
    m = jnp.mean(y, axis=0)                           # (ow, C)
    m_ref[0] = jnp.mean(m, axis=0, keepdims=True)     # (1, C) SE squeeze


def dwconv_s1(h, w, scale, bias, k):
    N, H, W, C = h.shape
    p = (k - 1) // 2
    hp = jnp.pad(h, ((0, 0), (p, p), (p, p), (0, 0)))
    Hp, Wp = H + 2 * p, W + 2 * p
    kern = functools.partial(_dw_s1_kernel, k=k, oh=H, ow=W)
    out, sq = pl.pallas_call(
        kern,
        out_shape=(jax.ShapeDtypeStruct((N, H, W, C), jnp.bfloat16),
                   jax.ShapeDtypeStruct((N, 1, C), jnp.float32)),
        grid=(N,),
        in_specs=[
            pl.BlockSpec((1, Hp, Wp, C), lambda n: (n, 0, 0, 0)),
            pl.BlockSpec((k * k, C), lambda n: (0, 0)),
            pl.BlockSpec((1, C), lambda n: (0, 0)),
            pl.BlockSpec((1, C), lambda n: (0, 0)),
        ],
        out_specs=(pl.BlockSpec((1, H, W, C), lambda n: (n, 0, 0, 0)),
                   pl.BlockSpec((1, 1, C), lambda n: (n, 0, 0))),
        compiler_params=pltpu.CompilerParams(dimension_semantics=("parallel",)),
    )(hp, w, scale.reshape(1, C), bias.reshape(1, C))
    return out, sq


# ------------- depthwise conv, stride 2: JAX im2col + fused reduce ---------------
# TODO(synk): fold the strided (stride-2) im2col for the 4 downsampling blocks and the
# stem into the kernel as well (needs halo BlockSpecs / in-kernel strided slices); it is
# currently done in JAX glue in bf16.

def _same_pad(x, k, s):
    N, H, W, C = x.shape
    oh = -(-H // s)
    ow = -(-W // s)
    ph = max((oh - 1) * s + k - H, 0)
    pw = max((ow - 1) * s + k - W, 0)
    xp = jnp.pad(x, ((0, 0), (ph // 2, ph - ph // 2), (pw // 2, pw - pw // 2), (0, 0)))
    return xp, oh, ow


def _shifted_windows(x, k, s):
    xp, oh, ow = _same_pad(x, k, s)
    cols = [xp[:, ky:ky + s * oh:s, kx:kx + s * ow:s, :]
            for ky in range(k) for kx in range(k)]
    return cols, oh, ow


def _dw_patch_kernel(p_ref, w_ref, s_ref, b_ref, o_ref, m_ref, *, kk):
    w = w_ref[...]                                    # (kk, C) f32
    acc = None
    for j in range(kk):
        tap = p_ref[0, j].astype(jnp.float32) * w[j]  # (OHW, C)
        acc = tap if acc is None else acc + tap
    y = acc * s_ref[0] + b_ref[0]
    y = y * jax.nn.sigmoid(y)
    o_ref[0] = y.astype(o_ref.dtype)
    m_ref[0] = jnp.mean(y, axis=0, keepdims=True)     # (1, C) SE squeeze


def dwconv_strided(h, w, scale, bias, k, s):
    cols, oh, ow = _shifted_windows(h, k, s)
    N, _, _, C = h.shape
    kk = k * k
    p = jnp.stack(cols, axis=1).reshape(N, kk, oh * ow, C)
    kern = functools.partial(_dw_patch_kernel, kk=kk)
    out, sq = pl.pallas_call(
        kern,
        out_shape=(jax.ShapeDtypeStruct((N, oh * ow, C), jnp.bfloat16),
                   jax.ShapeDtypeStruct((N, 1, C), jnp.float32)),
        grid=(N,),
        in_specs=[
            pl.BlockSpec((1, kk, oh * ow, C), lambda n: (n, 0, 0, 0)),
            pl.BlockSpec((kk, C), lambda n: (0, 0)),
            pl.BlockSpec((1, C), lambda n: (0, 0)),
            pl.BlockSpec((1, C), lambda n: (0, 0)),
        ],
        out_specs=(pl.BlockSpec((1, oh * ow, C), lambda n: (n, 0, 0)),
                   pl.BlockSpec((1, 1, C), lambda n: (n, 0, 0))),
        compiler_params=pltpu.CompilerParams(dimension_semantics=("parallel",)),
    )(p, w, scale.reshape(1, C), bias.reshape(1, C))
    return out, sq, oh, ow


# --------------------------- SE MLP (fused, tiny) --------------------------------

def _se_mlp_kernel(s_ref, rw_ref, rb_ref, ew_ref, eb_ref, o_ref):
    s = s_ref[...]                                                   # (N, Ce)
    r = jnp.dot(s, rw_ref[...], preferred_element_type=jnp.float32) + rb_ref[...]
    r = r * jax.nn.sigmoid(r)                                        # swish
    g = jnp.dot(r, ew_ref[...], preferred_element_type=jnp.float32) + eb_ref[...]
    o_ref[...] = jax.nn.sigmoid(g)


def se_gate(sq, rw, rb, ew, eb):
    N, C = sq.shape
    cse = rw.shape[1]
    return pl.pallas_call(
        _se_mlp_kernel,
        out_shape=jax.ShapeDtypeStruct((N, C), jnp.float32),
        in_specs=[_VMEM_SPEC] * 5,
        out_specs=_VMEM_SPEC,
    )(sq, rw, rb.reshape(1, cse), ew, eb.reshape(1, C))


# ------------- projection 1x1 conv + fused SE gating (+ residual) ----------------

def _proj_kernel(x_ref, g_ref, w_ref, s_ref, b_ref, o_ref):
    xg = (x_ref[0].astype(jnp.float32) * g_ref[0]).astype(jnp.bfloat16)
    y = jnp.dot(xg, w_ref[...], preferred_element_type=jnp.float32)
    o_ref[0] = (y * s_ref[...] + b_ref[...]).astype(o_ref.dtype)


def _proj_res_kernel(x_ref, g_ref, w_ref, s_ref, b_ref, r_ref, o_ref):
    xg = (x_ref[0].astype(jnp.float32) * g_ref[0]).astype(jnp.bfloat16)
    y = jnp.dot(xg, w_ref[...], preferred_element_type=jnp.float32)
    y = y * s_ref[...] + b_ref[...] + r_ref[0].astype(jnp.float32)
    o_ref[0] = y.astype(o_ref.dtype)


def proj_conv(hb, gate, w, scale, bias, residual=None, thw_target=512):
    N, HW, Ce = hb.shape
    Co = w.shape[1]
    thw = _tile(HW, thw_target)
    in_specs = [
        pl.BlockSpec((1, thw, Ce), lambda n, j: (n, j, 0)),
        pl.BlockSpec((1, 1, Ce), lambda n, j: (n, 0, 0)),
        pl.BlockSpec((Ce, Co), lambda n, j: (0, 0)),
        pl.BlockSpec((1, Co), lambda n, j: (0, 0)),
        pl.BlockSpec((1, Co), lambda n, j: (0, 0)),
    ]
    args = [hb, gate, w, scale.reshape(1, Co), bias.reshape(1, Co)]
    if residual is None:
        kern = _proj_kernel
    else:
        kern = _proj_res_kernel
        in_specs.append(pl.BlockSpec((1, thw, Co), lambda n, j: (n, j, 0)))
        args.append(residual)
    return pl.pallas_call(
        kern,
        out_shape=jax.ShapeDtypeStruct((N, HW, Co), jnp.bfloat16),
        grid=(N, HW // thw),
        in_specs=in_specs,
        out_specs=pl.BlockSpec((1, thw, Co), lambda n, j: (n, j, 0)),
        compiler_params=pltpu.CompilerParams(
            dimension_semantics=("parallel", "parallel")),
    )(*args)


# --------------------- head 1x1 conv + swish + global pool -----------------------

def _head_pool_kernel(x_ref, w_ref, s_ref, b_ref, o_ref):
    y = jnp.dot(x_ref[0], w_ref[...], preferred_element_type=jnp.float32)
    y = y * s_ref[...] + b_ref[...]
    y = y * jax.nn.sigmoid(y)
    o_ref[0] = jnp.mean(y, axis=0, keepdims=True)


def head_pool(x, w, scale, bias):
    N, HW, C = x.shape
    Co = w.shape[1]
    out = pl.pallas_call(
        _head_pool_kernel,
        out_shape=jax.ShapeDtypeStruct((N, 1, Co), jnp.float32),
        grid=(N,),
        in_specs=[
            pl.BlockSpec((1, HW, C), lambda n: (n, 0, 0)),
            pl.BlockSpec((C, Co), lambda n: (0, 0)),
            pl.BlockSpec((1, Co), lambda n: (0, 0)),
            pl.BlockSpec((1, Co), lambda n: (0, 0)),
        ],
        out_specs=pl.BlockSpec((1, 1, Co), lambda n: (n, 0, 0)),
        compiler_params=pltpu.CompilerParams(dimension_semantics=("parallel",)),
    )(x, w, scale.reshape(1, Co), bias.reshape(1, Co))
    return out.reshape(N, Co)


# --------------------------- parameter construction ------------------------------

# EfficientNet-B0 block args: (repeats, kernel, stride, expand, in_ch, out_ch, se_ratio)
BLOCKS_ARGS = [
    (1, 3, 1, 1, 32, 16, 0.25),
    (2, 3, 2, 6, 16, 24, 0.25),
    (2, 5, 2, 6, 24, 40, 0.25),
    (3, 3, 2, 6, 40, 80, 0.25),
    (3, 5, 1, 6, 80, 112, 0.25),
    (4, 5, 2, 6, 112, 192, 0.25),
    (1, 3, 1, 6, 192, 320, 0.25),
]


def _conv_w(key, fan_in, shape):
    return (jax.random.normal(key, shape) * (2.0 / fan_in) ** 0.5).astype(jnp.float32)


def _bn(key, c):
    k1, k2, k3, k4 = jax.random.split(key, 4)
    gamma = 1.0 + 0.1 * jax.random.normal(k1, (c,))
    beta = 0.1 * jax.random.normal(k2, (c,))
    mean = 0.1 * jax.random.normal(k3, (c,))
    var = 1.0 + 0.1 * jax.random.uniform(k4, (c,))
    scale = gamma / jnp.sqrt(var + BN_EPS)
    bias = beta - mean * scale
    return scale.astype(jnp.float32), bias.astype(jnp.float32)


def init_params(key):
    keys = iter(jax.random.split(key, 1024))
    nk = lambda: next(keys)
    params = {
        "stem_w": _conv_w(nk(), 27, (27, 32)).astype(jnp.bfloat16),   # Conv2d(3,32,3,s=2)
        "stem_bn": _bn(nk(), 32),
        "blocks": [],
    }
    for (r, k, s, e, ci, co, se) in BLOCKS_ARGS:
        for rep in range(r):
            cin = ci if rep == 0 else co
            stride = s if rep == 0 else 1
            cexp = cin * e
            cse = max(1, int(cin * se))
            b = {"cfg": (k, stride, e, cin, co, cexp, cse)}
            if e != 1:
                b["expand_w"] = _conv_w(nk(), cin, (cin, cexp)).astype(jnp.bfloat16)
                b["expand_bn"] = _bn(nk(), cexp)
            b["dw_w"] = _conv_w(nk(), k * k, (k * k, cexp))           # f32 (VPU path)
            b["dw_bn"] = _bn(nk(), cexp)
            b["se_rw"] = _conv_w(nk(), cexp, (cexp, cse))
            b["se_rb"] = (0.01 * jax.random.normal(nk(), (cse,))).astype(jnp.float32)
            b["se_ew"] = _conv_w(nk(), cse, (cse, cexp))
            b["se_eb"] = (0.01 * jax.random.normal(nk(), (cexp,))).astype(jnp.float32)
            b["proj_w"] = _conv_w(nk(), cexp, (cexp, co)).astype(jnp.bfloat16)
            b["proj_bn"] = _bn(nk(), co)
            params["blocks"].append(b)
    params["head_w"] = _conv_w(nk(), 320, (320, 1280)).astype(jnp.bfloat16)
    params["head_bn"] = _bn(nk(), 1280)
    return params


# ------------------------------- forward pass ------------------------------------

def stem(x, w, bn):
    # 3x3 stride-2 full conv via (bf16) im2col + M-tiled Pallas matmul (BN + swish fused)
    cols, oh, ow = _shifted_windows(x, 3, 2)
    N, _, _, C = x.shape
    patches = jnp.stack(cols, axis=3)                 # (N, oh, ow, 9, C)
    pm = patches.reshape(N * oh * ow, 9 * C)
    y = matmul_bn_act(pm, w, bn[0], bn[1], act="swish")
    return y.reshape(N, oh, ow, -1)


def mbconv(x, b):
    k, stride, e, cin, co, cexp, cse = b["cfg"]
    N, H, W, _ = x.shape
    if e != 1:  # expansion 1x1 conv + BN + swish (M-tiled matmul)
        h = matmul_bn_act(x.reshape(N * H * W, cin), b["expand_w"],
                          b["expand_bn"][0], b["expand_bn"][1], act="swish")
        h = h.reshape(N, H, W, cexp)
    else:
        h = x
    # depthwise conv + BN + swish (+ fused SE squeeze)
    if stride == 1:
        hb4, sq = dwconv_s1(h, b["dw_w"], b["dw_bn"][0], b["dw_bn"][1], k)
        oh, ow = H, W
        hb = hb4.reshape(N, oh * ow, cexp)
    else:
        hb, sq, oh, ow = dwconv_strided(h, b["dw_w"], b["dw_bn"][0], b["dw_bn"][1],
                                        k, stride)
    # squeeze-and-excitation gate (single fused kernel)
    gate = se_gate(sq.reshape(N, cexp), b["se_rw"], b["se_rb"], b["se_ew"], b["se_eb"])
    # projection 1x1 conv with fused SE gating + BN (+ residual)
    residual = x.reshape(N, H * W, cin) if (stride == 1 and cin == co) else None
    y = proj_conv(hb, gate.reshape(N, 1, cexp), b["proj_w"],
                  b["proj_bn"][0], b["proj_bn"][1], residual)
    return y.reshape(N, oh, ow, co)


def forward(params, image_nchw):
    # image_nchw: (N, 3, H, W) float32, PyTorch layout
    x = jnp.transpose(image_nchw, (0, 2, 3, 1)).astype(jnp.bfloat16)   # -> NHWC bf16
    x = stem(x, params["stem_w"], params["stem_bn"])
    for b in params["blocks"]:
        x = mbconv(x, b)
    N, H, W, C = x.shape
    feat = head_pool(x.reshape(N, H * W, C), params["head_w"],
                     params["head_bn"][0], params["head_bn"][1])       # (N, 1280) f32
    # dropout (eval mode) and the empty `_fc` (nn.Sequential()) are identities
    return feat


# ----------------------------------- main -----------------------------------------

if __name__ == "__main__":
    key = jax.random.PRNGKey(0)
    pkey, xkey = jax.random.split(key)
    params = init_params(pkey)
    # small-but-valid EfficientNet input (5 stride-2 stages: 32 -> 1 spatially)
    image = jax.random.normal(xkey, (2, 3, 32, 32), dtype=jnp.float32)
    out = forward(params, image)
    out = jax.block_until_ready(out)
    assert out.shape == (2, 1280), out.shape
    assert bool(jnp.all(jnp.isfinite(out)))
    print("KERNEL_OK")
</pallas_src>

<mosaic_0001>
module attributes {stable_mosaic.version = 11 : i64} {
  func.func @_mm_bn_act_kernel(%arg0: i32, %arg1: memref<512x27xbf16, #tpu.memory_space<vmem>>, %arg2: memref<27x32xbf16, #tpu.memory_space<vmem>>, %arg3: memref<1x32xf32, #tpu.memory_space<vmem>>, %arg4: memref<1x32xf32, #tpu.memory_space<vmem>>, %arg5: memref<512x32xbf16, #tpu.memory_space<vmem>>) attributes {dimension_semantics = [#tpu.dimension_semantics<parallel>], iteration_bounds = array<i64: 1>, scalar_prefetch = 0 : i64, scratch_operands = 0 : i64, tpu.core_type = #tpu.core_type<tc>, window_params = [{transform_indices = @transform_0, window_bounds = array<i64: 512, 27>}, {pipeline_mode = #tpu.pipeline_mode<synchronous>, transform_indices = @transform_1, window_bounds = array<i64: 27, 32>}, {pipeline_mode = #tpu.pipeline_mode<synchronous>, transform_indices = @transform_2, window_bounds = array<i64: 1, 32>}, {pipeline_mode = #tpu.pipeline_mode<synchronous>, transform_indices = @transform_3, window_bounds = array<i64: 1, 32>}, {transform_indices = @transform_4, window_bounds = array<i64: 512, 32>}]} {
    %c0 = arith.constant 0 : index
    %c0_0 = arith.constant 0 : index
    %0 = vector.load %arg1[%c0, %c0_0] : memref<512x27xbf16, #tpu.memory_space<vmem>>, vector<512x27xbf16>
    %c0_1 = arith.constant 0 : index
    %c0_2 = arith.constant 0 : index
    %1 = vector.load %arg2[%c0_1, %c0_2] : memref<27x32xbf16, #tpu.memory_space<vmem>>, vector<27x32xbf16>
    %cst = arith.constant dense<0.000000e+00> : vector<512x32xf32>
    %2 = tpu.matmul %0, %1, %cst {dimension_numbers = #tpu.dot_dimension_numbers<[1], [0], [0], [1], [0, 0, 1, 1], [], []>} : vector<512x27xbf16>, vector<27x32xbf16>, vector<512x32xf32> -> vector<512x32xf32>
    %c0_3 = arith.constant 0 : index
    %c0_4 = arith.constant 0 : index
    %3 = vector.load %arg3[%c0_3, %c0_4] : memref<1x32xf32, #tpu.memory_space<vmem>>, vector<1x32xf32>
    %4 = vector.broadcast %3 : vector<1x32xf32> to vector<512x32xf32>
    %5 = arith.mulf %2, %4 : vector<512x32xf32>
    %c0_5 = arith.constant 0 : index
    %c0_6 = arith.constant 0 : index
    %6 = vector.load %arg4[%c0_5, %c0_6] : memref<1x32xf32, #tpu.memory_space<vmem>>, vector<1x32xf32>
    %7 = vector.broadcast %6 : vector<1x32xf32> to vector<512x32xf32>
    %8 = arith.addf %5, %7 : vector<512x32xf32>
    %9 = arith.negf %8 : vector<512x32xf32>
    %10 = math.exp %9 : vector<512x32xf32>
    %cst_7 = arith.constant 1.000000e+00 : f32
    %11 = vector.broadcast %cst_7 : f32 to vector<512x32xf32>
    %12 = arith.addf %11, %10 : vector<512x32xf32>
    %13 = arith.divf %11, %12 : vector<512x32xf32>
    %14 = arith.mulf %8, %13 : vector<512x32xf32>
    %15 = arith.truncf %14 : vector<512x32xf32> to vector<512x32xbf16>
    %c0_8 = arith.constant 0 : index
    %c0_9 = arith.constant 0 : index
    %16 = vector.load %arg5[%c0_8, %c0_9] : memref<512x32xbf16, #tpu.memory_space<vmem>>, vector<512x32xbf16>
    tpu.vector_store %arg5[%c0_8, %c0_9], %15 {strides = array<i32>} : memref<512x32xbf16, #tpu.memory_space<vmem>>, vector<512x32xbf16>,
    return
  }
  func.func @transform_0(%arg0: i32) -> (i32, i32) {
    %c0_i32 = arith.constant 0 : i32
    %c0_i32_0 = arith.constant 0 : i32
    return %arg0, %c0_i32 : i32, i32
  }
  func.func @transform_1(%arg0: i32) -> (i32, i32) {
    %c0_i32 = arith.constant 0 : i32
    %c0_i32_0 = arith.constant 0 : i32
    %c0_i32_1 = arith.constant 0 : i32
    return %c0_i32, %c0_i32_0 : i32, i32
  }
  func.func @transform_2(%arg0: i32) -> (i32, i32) {
    %c0_i32 = arith.constant 0 : i32
    %c0_i32_0 = arith.constant 0 : i32
    %c0_i32_1 = arith.constant 0 : i32
    return %c0_i32, %c0_i32_0 : i32, i32
  }
  func.func @transform_3(%arg0: i32) -> (i32, i32) {
    %c0_i32 = arith.constant 0 : i32
    %c0_i32_0 = arith.constant 0 : i32
    %c0_i32_1 = arith.constant 0 : i32
    return %c0_i32, %c0_i32_0 : i32, i32
  }
  func.func @transform_4(%arg0: i32) -> (i32, i32) {
    %c0_i32 = arith.constant 0 : i32
    %c0_i32_0 = arith.constant 0 : i32
    return %arg0, %c0_i32 : i32, i32
  }
}

</mosaic_0001>

<llo_original>
// kernel: tpu_custom_call.1
$region0: #{tpu_custom_call.1}
  #allocation0 [shape = 'u32[]', space=smem, size = 0x4, offset = 0x4, fixed_abs, tag = 'smem constant byte address 0x4 - core index']
  #allocation1 [shape = 'u32[72,128]{1,0:T(1,128)}', space=vmem, size = 0x9000, scoped, tag = 'internal scratch']
  %s0 = inlined_call_operand.vmem [shape: bf16[512,27], index: 0, kind: input, shape index: {}]
  %s1 = inlined_call_operand.vmem [shape: bf16[27,32], index: 1, kind: input, shape index: {}]
  %s2 = inlined_call_operand.vmem [shape: f32[1,32], index: 2, kind: input, shape index: {}]
  %s3 = inlined_call_operand.vmem [shape: f32[1,32], index: 3, kind: input, shape index: {}]
  %s4 = inlined_call_operand.vmem [shape: bf16[512,32], index: 4, kind: output, shape index: {}]
  %s5 = sld [smem:[#allocation0]]
  $region26: #{tpu_custom_call.1} parent=0
    _
  %s7 = ssub.s32 1, %s5
  %s8 = scalar_select 0, %s7, %s5
  // Predicated region
  $region2: #{tpu_custom_call.1} parent=0 // pred_check
    _
  $region3: #{tpu_custom_call.1} parent=0 // pred_check_branch
    %10 = sbr.rel (0) target = $region5
  $region4: #{tpu_custom_call.1} parent=0 // pred_region
    _
  $region5: #{tpu_custom_call.1} parent=0 // pred_fallthru
    _
  // Predicated region
  $region6: #{tpu_custom_call.1} parent=0 // pred_check
    _
  $region7: #{tpu_custom_call.1} parent=0 // pred_check_branch
    %12 = sbr.rel (0) target = $region9
  $region8: #{tpu_custom_call.1} parent=0 // pred_region
    _
  $region9: #{tpu_custom_call.1} parent=0 // pred_fallthru
    _
  // Predicated region
  $region10: #{tpu_custom_call.1} parent=0 // pred_check
    _
  $region11: #{tpu_custom_call.1} parent=0 // pred_check_branch
    %14 = sbr.rel (0) target = $region13
  $region12: #{tpu_custom_call.1} parent=0 // pred_region
    _
  $region13: #{tpu_custom_call.1} parent=0 // pred_fallthru
    _
  // Predicated region
  $region14: #{tpu_custom_call.1} parent=0 // pred_check
    _
  $region15: #{tpu_custom_call.1} parent=0 // pred_check_branch
    %16 = sbr.rel (0) target = $region17
  $region16: #{tpu_custom_call.1} parent=0 // pred_region
    _
  $region17: #{tpu_custom_call.1} parent=0 // pred_fallthru
    _
  %v18 = vld [vmem:[%s0] sm:$0xf]
  %v19 = vld [vmem:[%s0 + $0x4] sm:$0xf]
  %v20 = vld [vmem:[%s0 + $0x8] sm:$0xf]
  %v21 = vld [vmem:[%s0 + $0xc] sm:$0xf]
  %v22 = vld [vmem:[%s0 + $0x10] sm:$0xf]
  %v23 = vld [vmem:[%s0 + $0x14] sm:$0xf]
  %v24 = vld [vmem:[%s0 + $0x18] sm:$0xf]
  %v25 = vld [vmem:[%s0 + $0x1c] sm:$0xf]
  %v26 = vld [vmem:[%s0 + $0x20] sm:$0xf]
  %v27 = vld [vmem:[%s0 + $0x24] sm:$0xf]
  %v28 = vld [vmem:[%s0 + $0x28] sm:$0xf]
  %v29 = vld [vmem:[%s0 + $0x2c] sm:$0xf]
  %v30 = vld [vmem:[%s0 + $0x30] sm:$0xf]
  %v31 = vld [vmem:[%s0 + $0x34] sm:$0xf]
  %v32 = vld [vmem:[%s0 + $0x38] sm:$0xf]
  %v33 = vld [vmem:[%s0 + $0x3c] sm:$0xf]
  %v34 = vld [vmem:[%s0 + $0x40] sm:$0xf]
  %v35 = vld [vmem:[%s0 + $0x44] sm:$0xf]
  %v36 = vld [vmem:[%s0 + $0x48] sm:$0xf]
  %v37 = vld [vmem:[%s0 + $0x4c] sm:$0xf]
  %v38 = vld [vmem:[%s0 + $0x50] sm:$0xf]
  %v39 = vld [vmem:[%s0 + $0x54] sm:$0xf]
  %v40 = vld [vmem:[%s0 + $0x58] sm:$0xf]
  %v41 = vld [vmem:[%s0 + $0x5c] sm:$0xf]
  %v42 = vld [vmem:[%s0 + $0x60] sm:$0xf]
  %v43 = vld [vmem:[%s0 + $0x64] sm:$0xf]
  %v44 = vld [vmem:[%s0 + $0x68] sm:$0xf]
  %v45 = vld [vmem:[%s0 + $0x6c] sm:$0xf]
  %v46 = vld [vmem:[%s0 + $0x70] sm:$0xf]
  %v47 = vld [vmem:[%s0 + $0x74] sm:$0xf]
  %v48 = vld [vmem:[%s0 + $0x78] sm:$0xf]
  %v49 = vld [vmem:[%s0 + $0x7c] sm:$0xf]
  %v50 = vld [vmem:[%s0 + $0x80] sm:$0xf]
  %v51 = vld [vmem:[%s0 + $0x84] sm:$0xf]
  %v52 = vld [vmem:[%s0 + $0x88] sm:$0xf]
  %v53 = vld [vmem:[%s0 + $0x8c] sm:$0xf]
  %v54 = vld [vmem:[%s0 + $0x90] sm:$0xf]
  %v55 = vld [vmem:[%s0 + $0x94] sm:$0xf]
  %v56 = vld [vmem:[%s0 + $0x98] sm:$0xf]
  %v57 = vld [vmem:[%s0 + $0x9c] sm:$0xf]
  %v58 = vld [vmem:[%s0 + $0xa0] sm:$0xf]
  %v59 = vld [vmem:[%s0 + $0xa4] sm:$0xf]
  %v60 = vld [vmem:[%s0 + $0xa8] sm:$0xf]
  %v61 = vld [vmem:[%s0 + $0xac] sm:$0xf]
  %v62 = vld [vmem:[%s0 + $0xb0] sm:$0xf]
  %v63 = vld [vmem:[%s0 + $0xb4] sm:$0xf]
  %v64 = vld [vmem:[%s0 + $0xb8] sm:$0xf]
  %v65 = vld [vmem:[%s0 + $0xbc] sm:$0xf]
  %v66 = vld [vmem:[%s0 + $0xc0] sm:$0xf]
  %v67 = vld [vmem:[%s0 + $0xc4] sm:$0xf]
  %v68 = vld [vmem:[%s0 + $0xc8] sm:$0xf]
  %v69 = vld [vmem:[%s0 + $0xcc] sm:$0xf]
  %v70 = vld [vmem:[%s0 + $0xd0] sm:$0xf]
  %v71 = vld [vmem:[%s0 + $0xd4] sm:$0xf]
  %v72 = vld [vmem:[%s0 + $0xd8] sm:$0xf]
  %v73 = vld [vmem:[%s0 + $0xdc] sm:$0xf]
  %v74 = vld [vmem:[%s0 + $0xe0] sm:$0xf]
  %v75 = vld [vmem:[%s0 + $0xe4] sm:$0xf]
  %v76 = vld [vmem:[%s0 + $0xe8] sm:$0xf]
  %v77 = vld [vmem:[%s0 + $0xec] sm:$0xf]
  %v78 = vld [vmem:[%s0 + $0xf0] sm:$0xf]
  %v79 = vld [vmem:[%s0 + $0xf4] sm:$0xf]
  %v80 = vld [vmem:[%s0 + $0xf8] sm:$0xf]
  %v81 = vld [vmem:[%s0 + $0xfc] sm:$0xf]
  %v82 = vld [vmem:[%s1] sm:$0xf]
  %v83 = vld [vmem:[%s1 + $0x4] sm:$0xf]
  %v84 = vld [vmem:[%s1 + $0x8] sm:$0xf]
  %v85 = vld [vmem:[%s1 + $0xc] sm:$0x3]
  %v150 = vunpack.c.l.b16 %v18
  %v151 = vunpack.c.l.b16 %v19
  %v152 = vunpack.c.l.b16 %v20
  %v153 = vunpack.c.l.b16 %v21
  %v154 = vunpack.c.l.b16 %v22
  %v155 = vunpack.c.l.b16 %v23
  %v156 = vunpack.c.l.b16 %v24
  %v157 = vunpack.c.l.b16 %v25
  %v158 = vunpack.c.l.b16 %v26
  %v159 = vunpack.c.l.b16 %v27
  %v160 = vunpack.c.l.b16 %v28
  %v161 = vunpack.c.l.b16 %v29
  %v162 = vunpack.c.l.b16 %v30
  %v163 = vunpack.c.l.b16 %v31
  %v164 = vunpack.c.l.b16 %v32
  %v165 = vunpack.c.l.b16 %v33
  %v166 = vunpack.c.l.b16 %v34
  %v167 = vunpack.c.l.b16 %v35
  %v168 = vunpack.c.l.b16 %v36
  %v169 = vunpack.c.l.b16 %v37
  %v170 = vunpack.c.l.b16 %v38
  %v171 = vunpack.c.l.b16 %v39
  %v172 = vunpack.c.l.b16 %v40
  %v173 = vunpack.c.l.b16 %v41
  %v174 = vunpack.c.l.b16 %v42
  %v175 = vunpack.c.l.b16 %v43
  %v176 = vunpack.c.l.b16 %v44
  %v177 = vunpack.c.l.b16 %v45
  %v178 = vunpack.c.l.b16 %v46
  %v179 = vunpack.c.l.b16 %v47
  %v180 = vunpack.c.l.b16 %v48
  %v181 = vunpack.c.l.b16 %v49
  %v182 = vunpack.c.l.b16 %v50
  %v183 = vunpack.c.l.b16 %v51
  %v184 = vunpack.c.l.b16 %v52
  %v185 = vunpack.c.l.b16 %v53
  %v186 = vunpack.c.l.b16 %v54
  %v187 = vunpack.c.l.b16 %v55
  %v188 = vunpack.c.l.b16 %v56
  %v189 = vunpack.c.l.b16 %v57
  %v190 = vunpack.c.l.b16 %v58
  %v191 = vunpack.c.l.b16 %v59
  %v192 = vunpack.c.l.b16 %v60
  %v193 = vunpack.c.l.b16 %v61
  %v194 = vunpack.c.l.b16 %v62
  %v195 = vunpack.c.l.b16 %v63
  %v196 = vunpack.c.l.b16 %v64
  %v197 = vunpack.c.l.b16 %v65
  %v198 = vunpack.c.l.b16 %v66
  %v199 = vunpack.c.l.b16 %v67
  %v200 = vunpack.c.l.b16 %v68
  %v201 = vunpack.c.l.b16 %v69
  %v202 = vunpack.c.l.b16 %v70
  %v203 = vunpack.c.l.b16 %v71
  %v204 = vunpack.c.l.b16 %v72
  %v205 = vunpack.c.l.b16 %v73
  %v206 = vunpack.c.l.b16 %v74
  %v207 = vunpack.c.l.b16 %v75
  %v208 = vunpack.c.l.b16 %v76
  %v209 = vunpack.c.l.b16 %v77
  %v210 = vunpack.c.l.b16 %v78
  %v211 = vunpack.c.l.b16 %v79
  %v212 = vunpack.c.l.b16 %v80
  %v213 = vunpack.c.l.b16 %v81
  %v214 = vpack.c.b16 %v151, %v150
  %v215 = vpack.c.b16 %v153, %v152
  %v216 = vpack.c.b16 %v155, %v154
  %v217 = vpack.c.b16 %v157, %v156
  %v218 = vpack.c.b16 %v159, %v158
  %v219 = vpack.c.b16 %v161, %v160
  %v220 = vpack.c.b16 %v163, %v162
  %v221 = vpack.c.b16 %v165, %v164
  %v222 = vpack.c.b16 %v167, %v166
  %v223 = vpack.c.b16 %v169, %v168
  %v224 = vpack.c.b16 %v171, %v170
  %v225 = vpack.c.b16 %v173, %v172
  %v226 = vpack.c.b16 %v175, %v174
  %v227 = vpack.c.b16 %v177, %v176
  %v228 = vpack.c.b16 %v179, %v178
  %v229 = vpack.c.b16 %v181, %v180
  %v230 = vpack.c.b16 %v183, %v182
  %v231 = vpack.c.b16 %v185, %v184
  %v232 = vpack.c.b16 %v187, %v186
  %v233 = vpack.c.b16 %v189, %v188
  %v234 = vpack.c.b16 %v191, %v190
  %v235 = vpack.c.b16 %v193, %v192
  %v236 = vpack.c.b16 %v195, %v194
  %v237 = vpack.c.b16 %v197, %v196
  %v238 = vpack.c.b16 %v199, %v198
  %v239 = vpack.c.b16 %v201, %v200
  %v240 = vpack.c.b16 %v203, %v202
  %v241 = vpack.c.b16 %v205, %v204
  %v242 = vpack.c.b16 %v207, %v206
  %v243 = vpack.c.b16 %v209, %v208
  %v244 = vpack.c.b16 %v211, %v210
  %v245 = vpack.c.b16 %v213, %v212
  %v250 = vunpack.c.l.b16 %v82
  %v251 = vunpack.c.l.b16 %v83
  %v252 = vunpack.c.l.b16 %v84
  %v253 = vunpack.c.l.b16 %v85
  %v254 = vpack.c.b16 %v251, %v250
  %v255 = vpack.c.b16 %v253, %v252
  %vm257 = vcmask 220160
  %v259 = vsel %vm257, %v214, 0
  %v262 = vsel %vm257, %v215, 0
  %v265 = vsel %vm257, %v216, 0
  %v268 = vsel %vm257, %v217, 0
  %v271 = vsel %vm257, %v218, 0
  %v274 = vsel %vm257, %v219, 0
  %v277 = vsel %vm257, %v220, 0
  %v280 = vsel %vm257, %v221, 0
  %v283 = vsel %vm257, %v222, 0
  %v286 = vsel %vm257, %v223, 0
  %v289 = vsel %vm257, %v224, 0
  %v292 = vsel %vm257, %v225, 0
  %v295 = vsel %vm257, %v226, 0
  %v298 = vsel %vm257, %v227, 0
  %v301 = vsel %vm257, %v228, 0
  %v304 = vsel %vm257, %v229, 0
  %v307 = vsel %vm257, %v230, 0
  %v310 = vsel %vm257, %v231, 0
  %v313 = vsel %vm257, %v232, 0
  %v316 = vsel %vm257, %v233, 0
  %v319 = vsel %vm257, %v234, 0
  %v322 = vsel %vm257, %v235, 0
  %v325 = vsel %vm257, %v236, 0
  %v328 = vsel %vm257, %v237, 0
  %v331 = vsel %vm257, %v238, 0
  %v334 = vsel %vm257, %v239, 0
  %v337 = vsel %vm257, %v240, 0
  %v340 = vsel %vm257, %v241, 0
  %v343 = vsel %vm257, %v242, 0
  %v346 = vsel %vm257, %v243, 0
  %v349 = vsel %vm257, %v244, 0
  %v352 = vsel %vm257, %v245, 0
  %vm354 = vcmask 1044480
  %vm355 = vcmask 1045504
  %v356 = vsel %vm354, 4294967295, 65535
  %v357 = vsel %vm355, %v356, 0
  %v359 = vand.u32 %v255, %v357
  %361 = vmatpush.bf16.msra.mxu0 0
  %362 = vmatpush.bf16.msra.mxu0 0
  %363 = vmatpush.bf16.msra.mxu0 0
  %364 = vmatpush.bf16.msra.mxu0 0
  %365 = vmatpush.bf16.msra.mxu0 0
  %366 = vmatpush.bf16.msra.mxu0 0
  %367 = vmatpush.bf16.msra.mxu0 %v359
  %368 = vmatpush.bf16.msra.mxu0 %v254
  %369 = vmatmul.bf16.gmra.mxu0 %v259
  %v370 = vpop.f32.mrf.mxu0
  %v371 = vadd.f32 0.0, %v370
  %v372 = vpop.f32.mrf.mxu0
  %v373 = vadd.f32 0.0, %v372
  %374 = vmatmul.bf16.gmra.mxu0 %v262
  %v375 = vpop.f32.mrf.mxu0
  %v376 = vadd.f32 0.0, %v375
  %v377 = vpop.f32.mrf.mxu0
  %v378 = vadd.f32 0.0, %v377
  %379 = vmatmul.bf16.gmra.mxu0 %v265
  %v380 = vpop.f32.mrf.mxu0
  %v381 = vadd.f32 0.0, %v380
  %v382 = vpop.f32.mrf.mxu0
  %v383 = vadd.f32 0.0, %v382
  %384 = vmatmul.bf16.gmra.mxu0 %v268
  %v385 = vpop.f32.mrf.mxu0
  %v386 = vadd.f32 0.0, %v385
  %v387 = vpop.f32.mrf.mxu0
  %v388 = vadd.f32 0.0, %v387
  %389 = vmatmul.bf16.gmra.mxu0 %v271
  %v390 = vpop.f32.mrf.mxu0
  %v391 = vadd.f32 0.0, %v390
  %v392 = vpop.f32.mrf.mxu0
  %v393 = vadd.f32 0.0, %v392
  %394 = vmatmul.bf16.gmra.mxu0 %v274
  %v395 = vpop.f32.mrf.mxu0
  %v396 = vadd.f32 0.0, %v395
  %v397 = vpop.f32.mrf.mxu0
  %v398 = vadd.f32 0.0, %v397
  %399 = vmatmul.bf16.gmra.mxu0 %v277
  %v400 = vpop.f32.mrf.mxu0
  %v401 = vadd.f32 0.0, %v400
  %v402 = vpop.f32.mrf.mxu0
  %v403 = vadd.f32 0.0, %v402
  %404 = vmatmul.bf16.gmra.mxu0 %v280
  %v405 = vpop.f32.mrf.mxu0
  %v406 = vadd.f32 0.0, %v405
  %v407 = vpop.f32.mrf.mxu0
  %v408 = vadd.f32 0.0, %v407
  %409 = vmatmul.bf16.gmra.mxu0 %v283
  %v410 = vpop.f32.mrf.mxu0
  %v411 = vadd.f32 0.0, %v410
  %v412 = vpop.f32.mrf.mxu0
  %v413 = vadd.f32 0.0, %v412
  %414 = vmatmul.bf16.gmra.mxu0 %v286
  %v415 = vpop.f32.mrf.mxu0
  %v416 = vadd.f32 0.0, %v415
  %v417 = vpop.f32.mrf.mxu0
  %v418 = vadd.f32 0.0, %v417
  %419 = vmatmul.bf16.gmra.mxu0 %v289
  %v420 = vpop.f32.mrf.mxu0
  %v421 = vadd.f32 0.0, %v420
  %v422 = vpop.f32.mrf.mxu0
  %v423 = vadd.f32 0.0, %v422
  %424 = vmatmul.bf16.gmra.mxu0 %v292
  %v425 = vpop.f32.mrf.mxu0
  %v426 = vadd.f32 0.0, %v425
  %v427 = vpop.f32.mrf.mxu0
  %v428 = vadd.f32 0.0, %v427
  %429 = vmatmul.bf16.gmra.mxu0 %v295
  %v430 = vpop.f32.mrf.mxu0
  %v431 = vadd.f32 0.0, %v430
  %v432 = vpop.f32.mrf.mxu0
  %v433 = vadd.f32 0.0, %v432
  %434 = vmatmul.bf16.gmra.mxu0 %v298
  %v435 = vpop.f32.mrf.mxu0
  %v436 = vadd.f32 0.0, %v435
  %v437 = vpop.f32.mrf.mxu0
  %v438 = vadd.f32 0.0, %v437
  %439 = vmatmul.bf16.gmra.mxu0 %v301
  %v440 = vpop.f32.mrf.mxu0
  %v441 = vadd.f32 0.0, %v440
  %v442 = vpop.f32.mrf.mxu0
  %v443 = vadd.f32 0.0, %v442
  %444 = vmatmul.bf16.gmra.mxu0 %v304
  %v445 = vpop.f32.mrf.mxu0
  %v446 = vadd.f32 0.0, %v445
  %v447 = vpop.f32.mrf.mxu0
  %v448 = vadd.f32 0.0, %v447
  %449 = vmatmul.bf16.gmra.mxu0 %v307
  %v450 = vpop.f32.mrf.mxu0
  %v451 = vadd.f32 0.0, %v450
  %v452 = vpop.f32.mrf.mxu0
  %v453 = vadd.f32 0.0, %v452
  %454 = vmatmul.bf16.gmra.mxu0 %v310
  %v455 = vpop.f32.mrf.mxu0
  %v456 = vadd.f32 0.0, %v455
  %v457 = vpop.f32.mrf.mxu0
  %v458 = vadd.f32 0.0, %v457
  %459 = vmatmul.bf16.gmra.mxu0 %v313
  %v460 = vpop.f32.mrf.mxu0
  %v461 = vadd.f32 0.0, %v460
  %v462 = vpop.f32.mrf.mxu0
  %v463 = vadd.f32 0.0, %v462
  %464 = vmatmul.bf16.gmra.mxu0 %v316
  %v465 = vpop.f32.mrf.mxu0
  %v466 = vadd.f32 0.0, %v465
  %v467 = vpop.f32.mrf.mxu0
  %v468 = vadd.f32 0.0, %v467
  %469 = vmatmul.bf16.gmra.mxu0 %v319
  %v470 = vpop.f32.mrf.mxu0
  %v471 = vadd.f32 0.0, %v470
  %v472 = vpop.f32.mrf.mxu0
  %v473 = vadd.f32 0.0, %v472
  %474 = vmatmul.bf16.gmra.mxu0 %v322
  %v475 = vpop.f32.mrf.mxu0
  %v476 = vadd.f32 0.0, %v475
  %v477 = vpop.f32.mrf.mxu0
  %v478 = vadd.f32 0.0, %v477
  %479 = vmatmul.bf16.gmra.mxu0 %v325
  %v480 = vpop.f32.mrf.mxu0
  %v481 = vadd.f32 0.0, %v480
  %v482 = vpop.f32.mrf.mxu0
  %v483 = vadd.f32 0.0, %v482
  %484 = vmatmul.bf16.gmra.mxu0 %v328
  %v485 = vpop.f32.mrf.mxu0
  %v486 = vadd.f32 0.0, %v485
  %v487 = vpop.f32.mrf.mxu0
  %v488 = vadd.f32 0.0, %v487
  %489 = vmatmul.bf16.gmra.mxu0 %v331
  %v490 = vpop.f32.mrf.mxu0
  %v491 = vadd.f32 0.0, %v490
  %v492 = vpop.f32.mrf.mxu0
  %v493 = vadd.f32 0.0, %v492
  %494 = vmatmul.bf16.gmra.mxu0 %v334
  %v495 = vpop.f32.mrf.mxu0
  %v496 = vadd.f32 0.0, %v495
  %v497 = vpop.f32.mrf.mxu0
  %v498 = vadd.f32 0.0, %v497
  %499 = vmatmul.bf16.gmra.mxu0 %v337
  %v500 = vpop.f32.mrf.mxu0
  %v501 = vadd.f32 0.0, %v500
  %v502 = vpop.f32.mrf.mxu0
  %v503 = vadd.f32 0.0, %v502
  %504 = vmatmul.bf16.gmra.mxu0 %v340
  %v505 = vpop.f32.mrf.mxu0
  %v506 = vadd.f32 0.0, %v505
  %v507 = vpop.f32.mrf.mxu0
  %v508 = vadd.f32 0.0, %v507
  %509 = vmatmul.bf16.gmra.mxu0 %v343
  %v510 = vpop.f32.mrf.mxu0
  %v511 = vadd.f32 0.0, %v510
  %v512 = vpop.f32.mrf.mxu0
  %v513 = vadd.f32 0.0, %v512
  %514 = vmatmul.bf16.gmra.mxu0 %v346
  %v515 = vpop.f32.mrf.mxu0
  %v516 = vadd.f32 0.0, %v515
  %v517 = vpop.f32.mrf.mxu0
  %v518 = vadd.f32 0.0, %v517
  %519 = vmatmul.bf16.gmra.mxu0 %v349
  %v520 = vpop.f32.mrf.mxu0
  %v521 = vadd.f32 0.0, %v520
  %v522 = vpop.f32.mrf.mxu0
  %v523 = vadd.f32 0.0, %v522
  %524 = vmatmul.bf16.gmra.mxu0 %v352
  %v525 = vpop.f32.mrf.mxu0
  %v526 = vadd.f32 0.0, %v525
  %v527 = vpop.f32.mrf.mxu0
  %v528 = vadd.f32 0.0, %v527
  %529 = vdwg.mxu0
  %v530 = vld [vmem:[%s2] sm:$0x1]
  %v532 = vperm.slane %v530, 0
  %v534 = vmul.f32 %v371, %v532
  %v535 = vmul.f32 %v373, %v532
  %v536 = vmul.f32 %v376, %v532
  %v537 = vmul.f32 %v378, %v532
  %v538 = vmul.f32 %v381, %v532
  %v539 = vmul.f32 %v383, %v532
  %v540 = vmul.f32 %v386, %v532
  %v541 = vmul.f32 %v388, %v532
  %v542 = vmul.f32 %v391, %v532
  %v543 = vmul.f32 %v393, %v532
  %v544 = vmul.f32 %v396, %v532
  %v545 = vmul.f32 %v398, %v532
  %v546 = vmul.f32 %v401, %v532
  %v547 = vmul.f32 %v403, %v532
  %v548 = vmul.f32 %v406, %v532
  %v549 = vmul.f32 %v408, %v532
  %v550 = vmul.f32 %v411, %v532
  %v551 = vmul.f32 %v413, %v532
  %v552 = vmul.f32 %v416, %v532
  %v553 = vmul.f32 %v418, %v532
  %v554 = vmul.f32 %v421, %v532
  %v555 = vmul.f32 %v423, %v532
  %v556 = vmul.f32 %v426, %v532
  %v557 = vmul.f32 %v428, %v532
  %v558 = vmul.f32 %v431, %v532
  %v559 = vmul.f32 %v433, %v532
  %v560 = vmul.f32 %v436, %v532
  %v561 = vmul.f32 %v438, %v532
  %v562 = vmul.f32 %v441, %v532
  %v563 = vmul.f32 %v443, %v532
  %v564 = vmul.f32 %v446, %v532
  %v565 = vmul.f32 %v448, %v532
  %v566 = vmul.f32 %v451, %v532
  %v567 = vmul.f32 %v453, %v532
  %v568 = vmul.f32 %v456, %v532
  %v569 = vmul.f32 %v458, %v532
  %v570 = vmul.f32 %v461, %v532
  %v571 = vmul.f32 %v463, %v532
  %v572 = vmul.f32 %v466, %v532
  %v573 = vmul.f32 %v468, %v532
  %v574 = vmul.f32 %v471, %v532
  %v575 = vmul.f32 %v473, %v532
  %v576 = vmul.f32 %v476, %v532
  %v577 = vmul.f32 %v478, %v532
  %v578 = vmul.f32 %v481, %v532
  %v579 = vmul.f32 %v483, %v532
  %v580 = vmul.f32 %v486, %v532
  %v581 = vmul.f32 %v488, %v532
  %v582 = vmul.f32 %v491, %v532
  %v583 = vmul.f32 %v493, %v532
  %v584 = vmul.f32 %v496, %v532
  %v585 = vmul.f32 %v498, %v532
  %v586 = vmul.f32 %v501, %v532
  %v587 = vmul.f32 %v503, %v532
  %v588 = vmul.f32 %v506, %v532
  %v589 = vmul.f32 %v508, %v532
  %v590 = vmul.f32 %v511, %v532
  %v591 = vmul.f32 %v513, %v532
  %v592 = vmul.f32 %v516, %v532
  %v593 = vmul.f32 %v518, %v532
  %v594 = vmul.f32 %v521, %v532
  %v595 = vmul.f32 %v523, %v532
  %v596 = vmul.f32 %v526, %v532
  %v597 = vmul.f32 %v528, %v532
  %v598 = vld [vmem:[%s3] sm:$0x1]
  %v600 = vperm.slane %v598, 0
  %v602 = vadd.f32 %v534, %v600
  %v603 = vadd.f32 %v535, %v600
  %v604 = vadd.f32 %v536, %v600
  %v605 = vadd.f32 %v537, %v600
  %v606 = vadd.f32 %v538, %v600
  %v607 = vadd.f32 %v539, %v600
  %v608 = vadd.f32 %v540, %v600
  %v609 = vadd.f32 %v541, %v600
  %v610 = vadd.f32 %v542, %v600
  %v611 = vadd.f32 %v543, %v600
  %v612 = vadd.f32 %v544, %v600
  %v613 = vadd.f32 %v545, %v600
  %v614 = vadd.f32 %v546, %v600
  %v615 = vadd.f32 %v547, %v600
  %v616 = vadd.f32 %v548, %v600
  %v617 = vadd.f32 %v549, %v600
  %v618 = vadd.f32 %v550, %v600
  %v619 = vadd.f32 %v551, %v600
  %v620 = vadd.f32 %v552, %v600
  %v621 = vadd.f32 %v553, %v600
  %v622 = vadd.f32 %v554, %v600
  %v623 = vadd.f32 %v555, %v600
  %v624 = vadd.f32 %v556, %v600
  %v625 = vadd.f32 %v557, %v600
  %v626 = vadd.f32 %v558, %v600
  %v627 = vadd.f32 %v559, %v600
  %v628 = vadd.f32 %v560, %v600
  %v629 = vadd.f32 %v561, %v600
  %v630 = vadd.f32 %v562, %v600
  %v631 = vadd.f32 %v563, %v600
  %v632 = vadd.f32 %v564, %v600
  %v633 = vadd.f32 %v565, %v600
  %v634 = vadd.f32 %v566, %v600
  %v635 = vadd.f32 %v567, %v600
  %v636 = vadd.f32 %v568, %v600
  %v637 = vadd.f32 %v569, %v600
  %v638 = vadd.f32 %v570, %v600
  %v639 = vadd.f32 %v571, %v600
  %v640 = vadd.f32 %v572, %v600
  %v641 = vadd.f32 %v573, %v600
  %v642 = vadd.f32 %v574, %v600
  %v643 = vadd.f32 %v575, %v600
  %v644 = vadd.f32 %v576, %v600
  %v645 = vadd.f32 %v577, %v600
  %v646 = vadd.f32 %v578, %v600
  %v647 = vadd.f32 %v579, %v600
  %v648 = vadd.f32 %v580, %v600
  %v649 = vadd.f32 %v581, %v600
  %v650 = vadd.f32 %v582, %v600
  %v651 = vadd.f32 %v583, %v600
  %v652 = vadd.f32 %v584, %v600
  %v653 = vadd.f32 %v585, %v600
  %v654 = vadd.f32 %v586, %v600
  %v655 = vadd.f32 %v587, %v600
  %v656 = vadd.f32 %v588, %v600
  %v657 = vadd.f32 %v589, %v600
  %v658 = vadd.f32 %v590, %v600
  %v659 = vadd.f32 %v591, %v600
  %v660 = vadd.f32 %v592, %v600
  %v661 = vadd.f32 %v593, %v600
  %v662 = vadd.f32 %v594, %v600
  %v663 = vadd.f32 %v595, %v600
  %v664 = vadd.f32 %v596, %v600
  %v665 = vadd.f32 %v597, %v600
  %v666 = vxor.u32 %v602, 2147483648
  %v667 = vxor.u32 %v603, 2147483648
  %v668 = vxor.u32 %v604, 2147483648
  %v669 = vxor.u32 %v605, 2147483648
  %v670 = vxor.u32 %v606, 2147483648
  %v671 = vxor.u32 %v607, 2147483648
  %v672 = vxor.u32 %v608, 2147483648
  %v673 = vxor.u32 %v609, 2147483648
  %v674 = vxor.u32 %v610, 2147483648
  %v675 = vxor.u32 %v611, 2147483648
  %v676 = vxor.u32 %v612, 2147483648
  %v677 = vxor.u32 %v613, 2147483648
  %v678 = vxor.u32 %v614, 2147483648
  %v679 = vxor.u32 %v615, 2147483648
  %v680 = vxor.u32 %v616, 2147483648
  %v681 = vxor.u32 %v617, 2147483648
  %v682 = vxor.u32 %v618, 2147483648
  %v683 = vxor.u32 %v619, 2147483648
  %v684 = vxor.u32 %v620, 2147483648
  %v685 = vxor.u32 %v621, 2147483648
  %v686 = vxor.u32 %v622, 2147483648
  %v687 = vxor.u32 %v623, 2147483648
  %v688 = vxor.u32 %v624, 2147483648
  %v689 = vxor.u32 %v625, 2147483648
  %v690 = vxor.u32 %v626, 2147483648
  %v691 = vxor.u32 %v627, 2147483648
  %v692 = vxor.u32 %v628, 2147483648
  %v693 = vxor.u32 %v629, 2147483648
  %v694 = vxor.u32 %v630, 2147483648
  %v695 = vxor.u32 %v631, 2147483648
  %v696 = vxor.u32 %v632, 2147483648
  %v697 = vxor.u32 %v633, 2147483648
  %v698 = vxor.u32 %v634, 2147483648
  %v699 = vxor.u32 %v635, 2147483648
  %v700 = vxor.u32 %v636, 2147483648
  %v701 = vxor.u32 %v637, 2147483648
  %v702 = vxor.u32 %v638, 2147483648
  %v703 = vxor.u32 %v639, 2147483648
  %v704 = vxor.u32 %v640, 2147483648
  %v705 = vxor.u32 %v641, 2147483648
  %v706 = vxor.u32 %v642, 2147483648
  %v707 = vxor.u32 %v643, 2147483648
  %v708 = vxor.u32 %v644, 2147483648
  %v709 = vxor.u32 %v645, 2147483648
  %v710 = vxor.u32 %v646, 2147483648
  %v711 = vxor.u32 %v647, 2147483648
  %v712 = vxor.u32 %v648, 2147483648
  %v713 = vxor.u32 %v649, 2147483648
  %v714 = vxor.u32 %v650, 2147483648
  %v715 = vxor.u32 %v651, 2147483648
  %v716 = vxor.u32 %v652, 2147483648
  %v717 = vxor.u32 %v653, 2147483648
  %v718 = vxor.u32 %v654, 2147483648
  %v719 = vxor.u32 %v655, 2147483648
  %v720 = vxor.u32 %v656, 2147483648
  %v721 = vxor.u32 %v657, 2147483648
  %v722 = vxor.u32 %v658, 2147483648
  %v723 = vxor.u32 %v659, 2147483648
  %v724 = vxor.u32 %v660, 2147483648
  %v725 = vxor.u32 %v661, 2147483648
  %v726 = vxor.u32 %v662, 2147483648
  %v727 = vxor.u32 %v663, 2147483648
  %v728 = vxor.u32 %v664, 2147483648
  %v729 = vxor.u32 %v665, 2147483648
  %v730 = vmul.f32 %v666, 1.442695
  %v731 = vpow.pop %v730
  %v732 = vmul.f32 %v667, 1.442695
  %v733 = vpow.pop %v732
  %v734 = vmul.f32 %v668, 1.442695
  %v735 = vpow.pop %v734
  %v736 = vmul.f32 %v669, 1.442695
  %v737 = vpow.pop %v736
  %v738 = vmul.f32 %v670, 1.442695
  %v739 = vpow.pop %v738
  %v740 = vmul.f32 %v671, 1.442695
  %v741 = vpow.pop %v740
  %v742 = vmul.f32 %v672, 1.442695
  %v743 = vpow.pop %v742
  %v744 = vmul.f32 %v673, 1.442695
  %v745 = vpow.pop %v744
  %v746 = vmul.f32 %v674, 1.442695
  %v747 = vpow.pop %v746
  %v748 = vmul.f32 %v675, 1.442695
  %v749 = vpow.pop %v748
  %v750 = vmul.f32 %v676, 1.442695
  %v751 = vpow.pop %v750
  %v752 = vmul.f32 %v677, 1.442695
  %v753 = vpow.pop %v752
  %v754 = vmul.f32 %v678, 1.442695
  %v755 = vpow.pop %v754
  %v756 = vmul.f32 %v679, 1.442695
  %v757 = vpow.pop %v756
  %v758 = vmul.f32 %v680, 1.442695
  %v759 = vpow.pop %v758
  %v760 = vmul.f32 %v681, 1.442695
  %v761 = vpow.pop %v760
  %v762 = vmul.f32 %v682, 1.442695
  %v763 = vpow.pop %v762
  %v764 = vmul.f32 %v683, 1.442695
  %v765 = vpow.pop %v764
  %v766 = vmul.f32 %v684, 1.442695
  %v767 = vpow.pop %v766
  %v768 = vmul.f32 %v685, 1.442695
  %v769 = vpow.pop %v768
  %v770 = vmul.f32 %v686, 1.442695
  %v771 = vpow.pop %v770
  %v772 = vmul.f32 %v687, 1.442695
  %v773 = vpow.pop %v772
  %v774 = vmul.f32 %v688, 1.442695
  %v775 = vpow.pop %v774
  %v776 = vmul.f32 %v689, 1.442695
  %v777 = vpow.pop %v776
  %v778 = vmul.f32 %v690, 1.442695
  %v779 = vpow.pop %v778
  %v780 = vmul.f32 %v691, 1.442695
  %v781 = vpow.pop %v780
  %v782 = vmul.f32 %v692, 1.442695
  %v783 = vpow.pop %v782
  %v784 = vmul.f32 %v693, 1.442695
  %v785 = vpow.pop %v784
  %v786 = vmul.f32 %v694, 1.442695
  %v787 = vpow.pop %v786
  %v788 = vmul.f32 %v695, 1.442695
  %v789 = vpow.pop %v788
  %v790 = vmul.f32 %v696, 1.442695
  %v791 = vpow.pop %v790
  %v792 = vmul.f32 %v697, 1.442695
  %v793 = vpow.pop %v792
  %v794 = vmul.f32 %v698, 1.442695
  %v795 = vpow.pop %v794
  %v796 = vmul.f32 %v699, 1.442695
  %v797 = vpow.pop %v796
  %v798 = vmul.f32 %v700, 1.442695
  %v799 = vpow.pop %v798
  %v800 = vmul.f32 %v701, 1.442695
  %v801 = vpow.pop %v800
  %v802 = vmul.f32 %v702, 1.442695
  %v803 = vpow.pop %v802
  %v804 = vmul.f32 %v703, 1.442695
  %v805 = vpow.pop %v804
  %v806 = vmul.f32 %v704, 1.442695
  %v807 = vpow.pop %v806
  %v808 = vmul.f32 %v705, 1.442695
  %v809 = vpow.pop %v808
  %v810 = vmul.f32 %v706, 1.442695
  %v811 = vpow.pop %v810
  %v812 = vmul.f32 %v707, 1.442695
  %v813 = vpow.pop %v812
  %v814 = vmul.f32 %v708, 1.442695
  %v815 = vpow.pop %v814
  %v816 = vmul.f32 %v709, 1.442695
  %v817 = vpow.pop %v816
  %v818 = vmul.f32 %v710, 1.442695
  %v819 = vpow.pop %v818
  %v820 = vmul.f32 %v711, 1.442695
  %v821 = vpow.pop %v820
  %v822 = vmul.f32 %v712, 1.442695
  %v823 = vpow.pop %v822
  %v824 = vmul.f32 %v713, 1.442695
  %v825 = vpow.pop %v824
  %v826 = vmul.f32 %v714, 1.442695
  %v827 = vpow.pop %v826
  %v828 = vmul.f32 %v715, 1.442695
  %v829 = vpow.pop %v828
  %v830 = vmul.f32 %v716, 1.442695
  %v831 = vpow.pop %v830
  %v832 = vmul.f32 %v717, 1.442695
  %v833 = vpow.pop %v832
  %v834 = vmul.f32 %v718, 1.442695
  %v835 = vpow.pop %v834
  %v836 = vmul.f32 %v719, 1.442695
  %v837 = vpow.pop %v836
  %v838 = vmul.f32 %v720, 1.442695
  %v839 = vpow.pop %v838
  %v840 = vmul.f32 %v721, 1.442695
  %v841 = vpow.pop %v840
  %v842 = vmul.f32 %v722, 1.442695
  %v843 = vpow.pop %v842
  %v844 = vmul.f32 %v723, 1.442695
  %v845 = vpow.pop %v844
  %v846 = vmul.f32 %v724, 1.442695
  %v847 = vpow.pop %v846
  %v848 = vmul.f32 %v725, 1.442695
  %v849 = vpow.pop %v848
  %v850 = vmul.f32 %v726, 1.442695
  %v851 = vpow.pop %v850
  %v852 = vmul.f32 %v727, 1.442695
  %v853 = vpow.pop %v852
  %v854 = vmul.f32 %v728, 1.442695
  %v855 = vpow.pop %v854
  %v856 = vmul.f32 %v729, 1.442695
  %v857 = vpow.pop %v856
  %v858 = vadd.f32 %v731, 1.0
  %v859 = vadd.f32 %v733, 1.0
  %v860 = vadd.f32 %v735, 1.0
  %v861 = vadd.f32 %v737, 1.0
  %v862 = vadd.f32 %v739, 1.0
  %v863 = vadd.f32 %v741, 1.0
  %v864 = vadd.f32 %v743, 1.0
  %v865 = vadd.f32 %v745, 1.0
  %v866 = vadd.f32 %v747, 1.0
  %v867 = vadd.f32 %v749, 1.0
  %v868 = vadd.f32 %v751, 1.0
  %v869 = vadd.f32 %v753, 1.0
  %v870 = vadd.f32 %v755, 1.0
  %v871 = vadd.f32 %v757, 1.0
  %v872 = vadd.f32 %v759, 1.0
  %v873 = vadd.f32 %v761, 1.0
  %v874 = vadd.f32 %v763, 1.0
  %v875 = vadd.f32 %v765, 1.0
  %v876 = vadd.f32 %v767, 1.0
  %v877 = vadd.f32 %v769, 1.0
  %v878 = vadd.f32 %v771, 1.0
  %v879 = vadd.f32 %v773, 1.0
  %v880 = vadd.f32 %v775, 1.0
  %v881 = vadd.f32 %v777, 1.0
  %v882 = vadd.f32 %v779, 1.0
  %v883 = vadd.f32 %v781, 1.0
  %v884 = vadd.f32 %v783, 1.0
  %v885 = vadd.f32 %v785, 1.0
  %v886 = vadd.f32 %v787, 1.0
  %v887 = vadd.f32 %v789, 1.0
  %v888 = vadd.f32 %v791, 1.0
  %v889 = vadd.f32 %v793, 1.0
  %v890 = vadd.f32 %v795, 1.0
  %v891 = vadd.f32 %v797, 1.0
  %v892 = vadd.f32 %v799, 1.0
  %v893 = vadd.f32 %v801, 1.0
  %v894 = vadd.f32 %v803, 1.0
  %v895 = vadd.f32 %v805, 1.0
  %v896 = vadd.f32 %v807, 1.0
  %v897 = vadd.f32 %v809, 1.0
  %v898 = vadd.f32 %v811, 1.0
  %v899 = vadd.f32 %v813, 1.0
  %v900 = vadd.f32 %v815, 1.0
  %v901 = vadd.f32 %v817, 1.0
  %v902 = vadd.f32 %v819, 1.0
  %v903 = vadd.f32 %v821, 1.0
  %v904 = vadd.f32 %v823, 1.0
  %v905 = vadd.f32 %v825, 1.0
  %v906 = vadd.f32 %v827, 1.0
  %v907 = vadd.f32 %v829, 1.0
  %v908 = vadd.f32 %v831, 1.0
  %v909 = vadd.f32 %v833, 1.0
  %v910 = vadd.f32 %v835, 1.0
  %v911 = vadd.f32 %v837, 1.0
  %v912 = vadd.f32 %v839, 1.0
  %v913 = vadd.f32 %v841, 1.0
  %v914 = vadd.f32 %v843, 1.0
  %v915 = vadd.f32 %v845, 1.0
  %v916 = vadd.f32 %v847, 1.0
  %v917 = vadd.f32 %v849, 1.0
  %v918 = vadd.f32 %v851, 1.0
  %v919 = vadd.f32 %v853, 1.0
  %v920 = vadd.f32 %v855, 1.0
  %v921 = vadd.f32 %v857, 1.0
  %v922 = vrcp.pop %v858
  %v923 = vmul.f32 %v858, %v922
  %v924 = vsub.f32 1.0, %v923
  %v925 = vmul.f32 %v922, %v924
  %v926 = vadd.f32 %v922, %v925
  %vm927 = vweird.f32 %v858
  %vm928 = vweird.f32 %v922
  %vm929 = vmor %vm927, %vm928
  %v930 = vsel %vm929, %v922, %v926
  %v931 = vand.u32 2147483647, %v858
  %vm932 = vcmp.eq.f32.partialorder %v931, 8.507059e+37
  %v933 = vand.u32 %v858, 2147483648
  %v934 = vor.u32 1.1754944e-38, %v933
  %v935 = vsel %vm932, %v934, %v930
  %v936 = vmul.f32 1.0, %v935
  %v937 = vrcp.pop %v859
  %v938 = vmul.f32 %v859, %v937
  %v939 = vsub.f32 1.0, %v938
  %v940 = vmul.f32 %v937, %v939
  %v941 = vadd.f32 %v937, %v940
  %vm942 = vweird.f32 %v859
  %vm943 = vweird.f32 %v937
  %vm944 = vmor %vm942, %vm943
  %v945 = vsel %vm944, %v937, %v941
  %v946 = vand.u32 2147483647, %v859
  %vm947 = vcmp.eq.f32.partialorder %v946, 8.507059e+37
  %v948 = vand.u32 %v859, 2147483648
  %v949 = vor.u32 1.1754944e-38, %v948
  %v950 = vsel %vm947, %v949, %v945
  %v951 = vmul.f32 1.0, %v950
  %v952 = vrcp.pop %v860
  %v953 = vmul.f32 %v860, %v952
  %v954 = vsub.f32 1.0, %v953
  %v955 = vmul.f32 %v952, %v954
  %v956 = vadd.f32 %v952, %v955
  %vm957 = vweird.f32 %v860
  %vm958 = vweird.f32 %v952
  %vm959 = vmor %vm957, %vm958
  %v960 = vsel %vm959, %v952, %v956
  %v961 = vand.u32 2147483647, %v860
  %vm962 = vcmp.eq.f32.partialorder %v961, 8.507059e+37
  %v963 = vand.u32 %v860, 2147483648
  %v964 = vor.u32 1.1754944e-38, %v963
  %v965 = vsel %vm962, %v964, %v960
  %v966 = vmul.f32 1.0, %v965
  %v967 = vrcp.pop %v861
  %v968 = vmul.f32 %v861, %v967
  %v969 = vsub.f32 1.0, %v968
  %v970 = vmul.f32 %v967, %v969
  %v971 = vadd.f32 %v967, %v970
  %vm972 = vweird.f32 %v861
  %vm973 = vweird.f32 %v967
  %vm974 = vmor %vm972, %vm973
  %v975 = vsel %vm974, %v967, %v971
  %v976 = vand.u32 2147483647, %v861
  %vm977 = vcmp.eq.f32.partialorder %v976, 8.507059e+37
  %v978 = vand.u32 %v861, 2147483648
  %v979 = vor.u32 1.1754944e-38, %v978
  %v980 = vsel %vm977, %v979, %v975
  %v981 = vmul.f32 1.0, %v980
  %v982 = vrcp.pop %v862
  %v983 = vmul.f32 %v862, %v982
  %v984 = vsub.f32 1.0, %v983
  %v985 = vmul.f32 %v982, %v984
  %v986 = vadd.f32 %v982, %v985
  %vm987 = vweird.f32 %v862
  %vm988 = vweird.f32 %v982
  %vm989 = vmor %vm987, %vm988
  %v990 = vsel %vm989, %v982, %v986
  %v991 = vand.u32 2147483647, %v862
  %vm992 = vcmp.eq.f32.partialorder %v991, 8.507059e+37
  %v993 = vand.u32 %v862, 2147483648
  %v994 = vor.u32 1.1754944e-38, %v993
  %v995 = vsel %vm992, %v994, %v990
  %v996 = vmul.f32 1.0, %v995
  %v997 = vrcp.pop %v863
  %v998 = vmul.f32 %v863, %v997
  %v999 = vsub.f32 1.0, %v998
  %v1000 = vmul.f32 %v997, %v999
  %v1001 = vadd.f32 %v997, %v1000
  %vm1002 = vweird.f32 %v863
  %vm1003 = vweird.f32 %v997
  %vm1004 = vmor %vm1002, %vm1003
  %v1005 = vsel %vm1004, %v997, %v1001
  %v1006 = vand.u32 2147483647, %v863
  %vm1007 = vcmp.eq.f32.partialorder %v1006, 8.507059e+37
  %v1008 = vand.u32 %v863, 2147483648
  %v1009 = vor.u32 1.1754944e-38, %v1008
  %v1010 = vsel %vm1007, %v1009, %v1005
  %v1011 = vmul.f32 1.0, %v1010
  %v1012 = vrcp.pop %v864
  %v1013 = vmul.f32 %v864, %v1012
  %v1014 = vsub.f32 1.0, %v1013
  %v1015 = vmul.f32 %v1012, %v1014
  %v1016 = vadd.f32 %v1012, %v1015
  %vm1017 = vweird.f32 %v864
  %vm1018 = vweird.f32 %v1012
  %vm1019 = vmor %vm1017, %vm1018
  %v1020 = vsel %vm1019, %v1012, %v1016
  %v1021 = vand.u32 2147483647, %v864
  %vm1022 = vcmp.eq.f32.partialorder %v1021, 8.507059e+37
  %v1023 = vand.u32 %v864, 2147483648
  %v1024 = vor.u32 1.1754944e-38, %v1023
  %v1025 = vsel %vm1022, %v1024, %v1020
  %v1026 = vmul.f32 1.0, %v1025
  %v1027 = vrcp.pop %v865
  %v1028 = vmul.f32 %v865, %v1027
  %v1029 = vsub.f32 1.0, %v1028
  %v1030 = vmul.f32 %v1027, %v1029
  %v1031 = vadd.f32 %v1027, %v1030
  %vm1032 = vweird.f32 %v865
  %vm1033 = vweird.f32 %v1027
  %vm1034 = vmor %vm1032, %vm1033
  %v1035 = vsel %vm1034, %v1027, %v1031
  %v1036 = vand.u32 2147483647, %v865
  %vm1037 = vcmp.eq.f32.partialorder %v1036, 8.507059e+37
  %v1038 = vand.u32 %v865, 2147483648
  %v1039 = vor.u32 1.1754944e-38, %v1038
  %v1040 = vsel %vm1037, %v1039, %v1035
  %v1041 = vmul.f32 1.0, %v1040
  %v1042 = vrcp.pop %v866
  %v1043 = vmul.f32 %v866, %v1042
  %v1044 = vsub.f32 1.0, %v1043
  %v1045 = vmul.f32 %v1042, %v1044
  %v1046 = vadd.f32 %v1042, %v1045
  %vm1047 = vweird.f32 %v866
  %vm1048 = vweird.f32 %v1042
  %vm1049 = vmor %vm1047, %vm1048
  %v1050 = vsel %vm1049, %v1042, %v1046
  %v1051 = vand.u32 2147483647, %v866
  %vm1052 = vcmp.eq.f32.partialorder %v1051, 8.507059e+37
  %v1053 = vand.u32 %v866, 2147483648
  %v1054 = vor.u32 1.1754944e-38, %v1053
  %v1055 = vsel %vm1052, %v1054, %v1050
  %v1056 = vmul.f32 1.0, %v1055
  %v1057 = vrcp.pop %v867
  %v1058 = vmul.f32 %v867, %v1057
  %v1059 = vsub.f32 1.0, %v1058
  %v1060 = vmul.f32 %v1057, %v1059
  %v1061 = vadd.f32 %v1057, %v1060
  %vm1062 = vweird.f32 %v867
  %vm1063 = vweird.f32 %v1057
  %vm1064 = vmor %vm1062, %vm1063
  %v1065 = vsel %vm1064, %v1057, %v1061
  %v1066 = vand.u32 2147483647, %v867
  %vm1067 = vcmp.eq.f32.partialorder %v1066, 8.507059e+37
  %v1068 = vand.u32 %v867, 2147483648
  %v1069 = vor.u32 1.1754944e-38, %v1068
  %v1070 = vsel %vm1067, %v1069, %v1065
  %v1071 = vmul.f32 1.0, %v1070
  %v1072 = vrcp.pop %v868
  %v1073 = vmul.f32 %v868, %v1072
  %v1074 = vsub.f32 1.0, %v1073
  %v1075 = vmul.f32 %v1072, %v1074
  %v1076 = vadd.f32 %v1072, %v1075
  %vm1077 = vweird.f32 %v868
  %vm1078 = vweird.f32 %v1072
  %vm1079 = vmor %vm1077, %vm1078
  %v1080 = vsel %vm1079, %v1072, %v1076
  %v1081 = vand.u32 2147483647, %v868
  %vm1082 = vcmp.eq.f32.partialorder %v1081, 8.507059e+37
  %v1083 = vand.u32 %v868, 2147483648
  %v1084 = vor.u32 1.1754944e-38, %v1083
  %v1085 = vsel %vm1082, %v1084, %v1080
  %v1086 = vmul.f32 1.0, %v1085
  %v1087 = vrcp.pop %v869
  %v1088 = vmul.f32 %v869, %v1087
  %v1089 = vsub.f32 1.0, %v1088
  %v1090 = vmul.f32 %v1087, %v1089
  %v1091 = vadd.f32 %v1087, %v1090
  %vm1092 = vweird.f32 %v869
  %vm1093 = vweird.f32 %v1087
  %vm1094 = vmor %vm1092, %vm1093
  %v1095 = vsel %vm1094, %v1087, %v1091
  %v1096 = vand.u32 2147483647, %v869
  %vm1097 = vcmp.eq.f32.partialorder %v1096, 8.507059e+37
  %v1098 = vand.u32 %v869, 2147483648
  %v1099 = vor.u32 1.1754944e-38, %v1098
  %v1100 = vsel %vm1097, %v1099, %v1095
  %v1101 = vmul.f32 1.0, %v1100
  %v1102 = vrcp.pop %v870
  %v1103 = vmul.f32 %v870, %v1102
  %v1104 = vsub.f32 1.0, %v1103
  %v1105 = vmul.f32 %v1102, %v1104
  %v1106 = vadd.f32 %v1102, %v1105
  %vm1107 = vweird.f32 %v870
  %vm1108 = vweird.f32 %v1102
  %vm1109 = vmor %vm1107, %vm1108
  %v1110 = vsel %vm1109, %v1102, %v1106
  %v1111 = vand.u32 2147483647, %v870
  %vm1112 = vcmp.eq.f32.partialorder %v1111, 8.507059e+37
  %v1113 = vand.u32 %v870, 2147483648
  %v1114 = vor.u32 1.1754944e-38, %v1113
  %v1115 = vsel %vm1112, %v1114, %v1110
  %v1116 = vmul.f32 1.0, %v1115
  %v1117 = vrcp.pop %v871
  %v1118 = vmul.f32 %v871, %v1117
  %v1119 = vsub.f32 1.0, %v1118
  %v1120 = vmul.f32 %v1117, %v1119
  %v1121 = vadd.f32 %v1117, %v1120
  %vm1122 = vweird.f32 %v871
  %vm1123 = vweird.f32 %v1117
  %vm1124 = vmor %vm1122, %vm1123
  %v1125 = vsel %vm1124, %v1117, %v1121
  %v1126 = vand.u32 2147483647, %v871
  %vm1127 = vcmp.eq.f32.partialorder %v1126, 8.507059e+37
  %v1128 = vand.u32 %v871, 2147483648
  %v1129 = vor.u32 1.1754944e-38, %v1128
  %v1130 = vsel %vm1127, %v1129, %v1125
  %v1131 = vmul.f32 1.0, %v1130
  %v1132 = vrcp.pop %v872
  %v1133 = vmul.f32 %v872, %v1132
  %v1134 = vsub.f32 1.0, %v1133
  %v1135 = vmul.f32 %v1132, %v1134
  %v1136 = vadd.f32 %v1132, %v1135
  %vm1137 = vweird.f32 %v872
  %vm1138 = vweird.f32 %v1132
  %vm1139 = vmor %vm1137, %vm1138
  %v1140 = vsel %vm1139, %v1132, %v1136
  %v1141 = vand.u32 2147483647, %v872
  %vm1142 = vcmp.eq.f32.partialorder %v1141, 8.507059e+37
  %v1143 = vand.u32 %v872, 2147483648
  %v1144 = vor.u32 1.1754944e-38, %v1143
  %v1145 = vsel %vm1142, %v1144, %v1140
  %v1146 = vmul.f32 1.0, %v1145
  %v1147 = vrcp.pop %v873
  %v1148 = vmul.f32 %v873, %v1147
  %v1149 = vsub.f32 1.0, %v1148
  %v1150 = vmul.f32 %v1147, %v1149
  %v1151 = vadd.f32 %v1147, %v1150
  %vm1152 = vweird.f32 %v873
  %vm1153 = vweird.f32 %v1147
  %vm1154 = vmor %vm1152, %vm1153
  %v1155 = vsel %vm1154, %v1147, %v1151
  %v1156 = vand.u32 2147483647, %v873
  %vm1157 = vcmp.eq.f32.partialorder %v1156, 8.507059e+37
  %v1158 = vand.u32 %v873, 2147483648
  %v1159 = vor.u32 1.1754944e-38, %v1158
  %v1160 = vsel %vm1157, %v1159, %v1155
  %v1161 = vmul.f32 1.0, %v1160
  %v1162 = vrcp.pop %v874
  %v1163 = vmul.f32 %v874, %v1162
  %v1164 = vsub.f32 1.0, %v1163
  %v1165 = vmul.f32 %v1162, %v1164
  %v1166 = vadd.f32 %v1162, %v1165
  %vm1167 = vweird.f32 %v874
  %vm1168 = vweird.f32 %v1162
  %vm1169 = vmor %vm1167, %vm1168
  %v1170 = vsel %vm1169, %v1162, %v1166
  %v1171 = vand.u32 2147483647, %v874
  %vm1172 = vcmp.eq.f32.partialorder %v1171, 8.507059e+37
  %v1173 = vand.u32 %v874, 2147483648
  %v1174 = vor.u32 1.1754944e-38, %v1173
  %v1175 = vsel %vm1172, %v1174, %v1170
  %v1176 = vmul.f32 1.0, %v1175
  %v1177 = vrcp.pop %v875
  %v1178 = vmul.f32 %v875, %v1177
  %v1179 = vsub.f32 1.0, %v1178
  %v1180 = vmul.f32 %v1177, %v1179
  %v1181 = vadd.f32 %v1177, %v1180
  %vm1182 = vweird.f32 %v875
  %vm1183 = vweird.f32 %v1177
  %vm1184 = vmor %vm1182, %vm1183
  %v1185 = vsel %vm1184, %v1177, %v1181
  %v1186 = vand.u32 2147483647, %v875
  %vm1187 = vcmp.eq.f32.partialorder %v1186, 8.507059e+37
  %v1188 = vand.u32 %v875, 2147483648
  %v1189 = vor.u32 1.1754944e-38, %v1188
  %v1190 = vsel %vm1187, %v1189, %v1185
  %v1191 = vmul.f32 1.0, %v1190
  %v1192 = vrcp.pop %v876
  %v1193 = vmul.f32 %v876, %v1192
  %v1194 = vsub.f32 1.0, %v1193
  %v1195 = vmul.f32 %v1192, %v1194
  %v1196 = vadd.f32 %v1192, %v1195
  %vm1197 = vweird.f32 %v876
  %vm1198 = vweird.f32 %v1192
  %vm1199 = vmor %vm1197, %vm1198
  %v1200 = vsel %vm1199, %v1192, %v1196
  %v1201 = vand.u32 2147483647, %v876
  %vm1202 = vcmp.eq.f32.partialorder %v1201, 8.507059e+37
  %v1203 = vand.u32 %v876, 2147483648
  %v1204 = vor.u32 1.1754944e-38, %v1203
  %v1205 = vsel %vm1202, %v1204, %v1200
  %v1206 = vmul.f32 1.0, %v1205
  %v1207 = vrcp.pop %v877
  %v1208 = vmul.f32 %v877, %v1207
  %v1209 = vsub.f32 1.0, %v1208
  %v1210 = vmul.f32 %v1207, %v1209
  %v1211 = vadd.f32 %v1207, %v1210
  %vm1212 = vweird.f32 %v877
  %vm1213 = vweird.f32 %v1207
  %vm1214 = vmor %vm1212, %vm1213
  %v1215 = vsel %vm1214, %v1207, %v1211
  %v1216 = vand.u32 2147483647, %v877
  %vm1217 = vcmp.eq.f32.partialorder %v1216, 8.507059e+37
  %v1218 = vand.u32 %v877, 2147483648
  %v1219 = vor.u32 1.1754944e-38, %v1218
  %v1220 = vsel %vm1217, %v1219, %v1215
  %v1221 = vmul.f32 1.0, %v1220
  %v1222 = vrcp.pop %v878
  %v1223 = vmul.f32 %v878, %v1222
  %v1224 = vsub.f32 1.0, %v1223
  %v1225 = vmul.f32 %v1222, %v1224
  %v1226 = vadd.f32 %v1222, %v1225
  %vm1227 = vweird.f32 %v878
  %vm1228 = vweird.f32 %v1222
  %vm1229 = vmor %vm1227, %vm1228
  %v1230 = vsel %vm1229, %v1222, %v1226
  %v1231 = vand.u32 2147483647, %v878
  %vm1232 = vcmp.eq.f32.partialorder %v1231, 8.507059e+37
  %v1233 = vand.u32 %v878, 2147483648
  %v1234 = vor.u32 1.1754944e-38, %v1233
  %v1235 = vsel %vm1232, %v1234, %v1230
  %v1236 = vmul.f32 1.0, %v1235
  %v1237 = vrcp.pop %v879
  %v1238 = vmul.f32 %v879, %v1237
  %v1239 = vsub.f32 1.0, %v1238
  %v1240 = vmul.f32 %v1237, %v1239
  %v1241 = vadd.f32 %v1237, %v1240
  %vm1242 = vweird.f32 %v879
  %vm1243 = vweird.f32 %v1237
  %vm1244 = vmor %vm1242, %vm1243
  %v1245 = vsel %vm1244, %v1237, %v1241
  %v1246 = vand.u32 2147483647, %v879
  %vm1247 = vcmp.eq.f32.partialorder %v1246, 8.507059e+37
  %v1248 = vand.u32 %v879, 2147483648
  %v1249 = vor.u32 1.1754944e-38, %v1248
  %v1250 = vsel %vm1247, %v1249, %v1245
  %v1251 = vmul.f32 1.0, %v1250
  %v1252 = vrcp.pop %v880
  %v1253 = vmul.f32 %v880, %v1252
  %v1254 = vsub.f32 1.0, %v1253
  %v1255 = vmul.f32 %v1252, %v1254
  %v1256 = vadd.f32 %v1252, %v1255
  %vm1257 = vweird.f32 %v880
  %vm1258 = vweird.f32 %v1252
  %vm1259 = vmor %vm1257, %vm1258
  %v1260 = vsel %vm1259, %v1252, %v1256
  %v1261 = vand.u32 2147483647, %v880
  %vm1262 = vcmp.eq.f32.partialorder %v1261, 8.507059e+37
  %v1263 = vand.u32 %v880, 2147483648
  %v1264 = vor.u32 1.1754944e-38, %v1263
  %v1265 = vsel %vm1262, %v1264, %v1260
  %v1266 = vmul.f32 1.0, %v1265
  %v1267 = vrcp.pop %v881
  %v1268 = vmul.f32 %v881, %v1267
  %v1269 = vsub.f32 1.0, %v1268
  %v1270 = vmul.f32 %v1267, %v1269
  %v1271 = vadd.f32 %v1267, %v1270
  %vm1272 = vweird.f32 %v881
  %vm1273 = vweird.f32 %v1267
  %vm1274 = vmor %vm1272, %vm1273
  %v1275 = vsel %vm1274, %v1267, %v1271
  %v1276 = vand.u32 2147483647, %v881
  %vm1277 = vcmp.eq.f32.partialorder %v1276, 8.507059e+37
  %v1278 = vand.u32 %v881, 2147483648
  %v1279 = vor.u32 1.1754944e-38, %v1278
  %v1280 = vsel %vm1277, %v1279, %v1275
  %v1281 = vmul.f32 1.0, %v1280
  %v1282 = vrcp.pop %v882
  %v1283 = vmul.f32 %v882, %v1282
  %v1284 = vsub.f32 1.0, %v1283
  %v1285 = vmul.f32 %v1282, %v1284
  %v1286 = vadd.f32 %v1282, %v1285
  %vm1287 = vweird.f32 %v882
  %vm1288 = vweird.f32 %v1282
  %vm1289 = vmor %vm1287, %vm1288
  %v1290 = vsel %vm1289, %v1282, %v1286
  %v1291 = vand.u32 2147483647, %v882
  %vm1292 = vcmp.eq.f32.partialorder %v1291, 8.507059e+37
  %v1293 = vand.u32 %v882, 2147483648
  %v1294 = vor.u32 1.1754944e-38, %v1293
  %v1295 = vsel %vm1292, %v1294, %v1290
  %v1296 = vmul.f32 1.0, %v1295
  %v1297 = vrcp.pop %v883
  %v1298 = vmul.f32 %v883, %v1297
  %v1299 = vsub.f32 1.0, %v1298
  %v1300 = vmul.f32 %v1297, %v1299
  %v1301 = vadd.f32 %v1297, %v1300
  %vm1302 = vweird.f32 %v883
  %vm1303 = vweird.f32 %v1297
  %vm1304 = vmor %vm1302, %vm1303
  %v1305 = vsel %vm1304, %v1297, %v1301
  %v1306 = vand.u32 2147483647, %v883
  %vm1307 = vcmp.eq.f32.partialorder %v1306, 8.507059e+37
  %v1308 = vand.u32 %v883, 2147483648
  %v1309 = vor.u32 1.1754944e-38, %v1308
  %v1310 = vsel %vm1307, %v1309, %v1305
  %v1311 = vmul.f32 1.0, %v1310
  %v1312 = vrcp.pop %v884
  %v1313 = vmul.f32 %v884, %v1312
  %v1314 = vsub.f32 1.0, %v1313
  %v1315 = vmul.f32 %v1312, %v1314
  %v1316 = vadd.f32 %v1312, %v1315
  %vm1317 = vweird.f32 %v884
  %vm1318 = vweird.f32 %v1312
  %vm1319 = vmor %vm1317, %vm1318
  %v1320 = vsel %vm1319, %v1312, %v1316
  %v1321 = vand.u32 2147483647, %v884
  %vm1322 = vcmp.eq.f32.partialorder %v1321, 8.507059e+37
  %v1323 = vand.u32 %v884, 2147483648
  %v1324 = vor.u32 1.1754944e-38, %v1323
  %v1325 = vsel %vm1322, %v1324, %v1320
  %v1326 = vmul.f32 1.0, %v1325
  %v1327 = vrcp.pop %v885
  %v1328 = vmul.f32 %v885, %v1327
  %v1329 = vsub.f32 1.0, %v1328
  %v1330 = vmul.f32 %v1327, %v1329
  %v1331 = vadd.f32 %v1327, %v1330
  %vm1332 = vweird.f32 %v885
  %vm1333 = vweird.f32 %v1327
  %vm1334 = vmor %vm1332, %vm1333
  %v1335 = vsel %vm1334, %v1327, %v1331
  %v1336 = vand.u32 2147483647, %v885
  %vm1337 = vcmp.eq.f32.partialorder %v1336, 8.507059e+37
  %v1338 = vand.u32 %v885, 2147483648
  %v1339 = vor.u32 1.1754944e-38, %v1338
  %v1340 = vsel %vm1337, %v1339, %v1335
  %v1341 = vmul.f32 1.0, %v1340
  %v1342 = vrcp.pop %v886
  %v1343 = vmul.f32 %v886, %v1342
  %v1344 = vsub.f32 1.0, %v1343
  %v1345 = vmul.f32 %v1342, %v1344
  %v1346 = vadd.f32 %v1342, %v1345
  %vm1347 = vweird.f32 %v886
  %vm1348 = vweird.f32 %v1342
  %vm1349 = vmor %vm1347, %vm1348
  %v1350 = vsel %vm1349, %v1342, %v1346
  %v1351 = vand.u32 2147483647, %v886
  %vm1352 = vcmp.eq.f32.partialorder %v1351, 8.507059e+37
  %v1353 = vand.u32 %v886, 2147483648
  %v1354 = vor.u32 1.1754944e-38, %v1353
  %v1355 = vsel %vm1352, %v1354, %v1350
  %v1356 = vmul.f32 1.0, %v1355
  %v1357 = vrcp.pop %v887
  %v1358 = vmul.f32 %v887, %v1357
  %v1359 = vsub.f32 1.0, %v1358
  %v1360 = vmul.f32 %v1357, %v1359
  %v1361 = vadd.f32 %v1357, %v1360
  %vm1362 = vweird.f32 %v887
  %vm1363 = vweird.f32 %v1357
  %vm1364 = vmor %vm1362, %vm1363
  %v1365 = vsel %vm1364, %v1357, %v1361
  %v1366 = vand.u32 2147483647, %v887
  %vm1367 = vcmp.eq.f32.partialorder %v1366, 8.507059e+37
  %v1368 = vand.u32 %v887, 2147483648
  %v1369 = vor.u32 1.1754944e-38, %v1368
  %v1370 = vsel %vm1367, %v1369, %v1365
  %v1371 = vmul.f32 1.0, %v1370
  %v1372 = vrcp.pop %v888
  %v1373 = vmul.f32 %v888, %v1372
  %v1374 = vsub.f32 1.0, %v1373
  %v1375 = vmul.f32 %v1372, %v1374
  %v1376 = vadd.f32 %v1372, %v1375
  %vm1377 = vweird.f32 %v888
  %vm1378 = vweird.f32 %v1372
  %vm1379 = vmor %vm1377, %vm1378
  %v1380 = vsel %vm1379, %v1372, %v1376
  %v1381 = vand.u32 2147483647, %v888
  %vm1382 = vcmp.eq.f32.partialorder %v1381, 8.507059e+37
  %v1383 = vand.u32 %v888, 2147483648
  %v1384 = vor.u32 1.1754944e-38, %v1383
  %v1385 = vsel %vm1382, %v1384, %v1380
  %v1386 = vmul.f32 1.0, %v1385
  %v1387 = vrcp.pop %v889
  %v1388 = vmul.f32 %v889, %v1387
  %v1389 = vsub.f32 1.0, %v1388
  %v1390 = vmul.f32 %v1387, %v1389
  %v1391 = vadd.f32 %v1387, %v1390
  %vm1392 = vweird.f32 %v889
  %vm1393 = vweird.f32 %v1387
  %vm1394 = vmor %vm1392, %vm1393
  %v1395 = vsel %vm1394, %v1387, %v1391
  %v1396 = vand.u32 2147483647, %v889
  %vm1397 = vcmp.eq.f32.partialorder %v1396, 8.507059e+37
  %v1398 = vand.u32 %v889, 2147483648
  %v1399 = vor.u32 1.1754944e-38, %v1398
  %v1400 = vsel %vm1397, %v1399, %v1395
  %v1401 = vmul.f32 1.0, %v1400
  %v1402 = vrcp.pop %v890
  %v1403 = vmul.f32 %v890, %v1402
  %v1404 = vsub.f32 1.0, %v1403
  %v1405 = vmul.f32 %v1402, %v1404
  %v1406 = vadd.f32 %v1402, %v1405
  %vm1407 = vweird.f32 %v890
  %vm1408 = vweird.f32 %v1402
  %vm1409 = vmor %vm1407, %vm1408
  %v1410 = vsel %vm1409, %v1402, %v1406
  %v1411 = vand.u32 2147483647, %v890
  %vm1412 = vcmp.eq.f32.partialorder %v1411, 8.507059e+37
  %v1413 = vand.u32 %v890, 2147483648
  %v1414 = vor.u32 1.1754944e-38, %v1413
  %v1415 = vsel %vm1412, %v1414, %v1410
  %v1416 = vmul.f32 1.0, %v1415
  %v1417 = vrcp.pop %v891
  %v1418 = vmul.f32 %v891, %v1417
  %v1419 = vsub.f32 1.0, %v1418
  %v1420 = vmul.f32 %v1417, %v1419
  %v1421 = vadd.f32 %v1417, %v1420
  %vm1422 = vweird.f32 %v891
  %vm1423 = vweird.f32 %v1417
  %vm1424 = vmor %vm1422, %vm1423
  %v1425 = vsel %vm1424, %v1417, %v1421
  %v1426 = vand.u32 2147483647, %v891
  %vm1427 = vcmp.eq.f32.partialorder %v1426, 8.507059e+37
  %v1428 = vand.u32 %v891, 2147483648
  %v1429 = vor.u32 1.1754944e-38, %v1428
  %v1430 = vsel %vm1427, %v1429, %v1425
  %v1431 = vmul.f32 1.0, %v1430
  %v1432 = vrcp.pop %v892
  %v1433 = vmul.f32 %v892, %v1432
  %v1434 = vsub.f32 1.0, %v1433
  %v1435 = vmul.f32 %v1432, %v1434
  %v1436 = vadd.f32 %v1432, %v1435
  %vm1437 = vweird.f32 %v892
  %vm1438 = vweird.f32 %v1432
  %vm1439 = vmor %vm1437, %vm1438
  %v1440 = vsel %vm1439, %v1432, %v1436
  %v1441 = vand.u32 2147483647, %v892
  %vm1442 = vcmp.eq.f32.partialorder %v1441, 8.507059e+37
  %v1443 = vand.u32 %v892, 2147483648
  %v1444 = vor.u32 1.1754944e-38, %v1443
  %v1445 = vsel %vm1442, %v1444, %v1440
  %v1446 = vmul.f32 1.0, %v1445
  %v1447 = vrcp.pop %v893
  %v1448 = vmul.f32 %v893, %v1447
  %v1449 = vsub.f32 1.0, %v1448
  %v1450 = vmul.f32 %v1447, %v1449
  %v1451 = vadd.f32 %v1447, %v1450
  %vm1452 = vweird.f32 %v893
  %vm1453 = vweird.f32 %v1447
  %vm1454 = vmor %vm1452, %vm1453
  %v1455 = vsel %vm1454, %v1447, %v1451
  %v1456 = vand.u32 2147483647, %v893
  %vm1457 = vcmp.eq.f32.partialorder %v1456, 8.507059e+37
  %v1458 = vand.u32 %v893, 2147483648
  %v1459 = vor.u32 1.1754944e-38, %v1458
  %v1460 = vsel %vm1457, %v1459, %v1455
  %v1461 = vmul.f32 1.0, %v1460
  %v1462 = vrcp.pop %v894
  %v1463 = vmul.f32 %v894, %v1462
  %v1464 = vsub.f32 1.0, %v1463
  %v1465 = vmul.f32 %v1462, %v1464
  %v1466 = vadd.f32 %v1462, %v1465
  %vm1467 = vweird.f32 %v894
  %vm1468 = vweird.f32 %v1462
  %vm1469 = vmor %vm1467, %vm1468
  %v1470 = vsel %vm1469, %v1462, %v1466
  %v1471 = vand.u32 2147483647, %v894
  %vm1472 = vcmp.eq.f32.partialorder %v1471, 8.507059e+37
  %v1473 = vand.u32 %v894, 2147483648
  %v1474 = vor.u32 1.1754944e-38, %v1473
  %v1475 = vsel %vm1472, %v1474, %v1470
  %v1476 = vmul.f32 1.0, %v1475
  %v1477 = vrcp.pop %v895
  %v1478 = vmul.f32 %v895, %v1477
  %v1479 = vsub.f32 1.0, %v1478
  %v1480 = vmul.f32 %v1477, %v1479
  %v1481 = vadd.f32 %v1477, %v1480
  %vm1482 = vweird.f32 %v895
  %vm1483 = vweird.f32 %v1477
  %vm1484 = vmor %vm1482, %vm1483
  %v1485 = vsel %vm1484, %v1477, %v1481
  %v1486 = vand.u32 2147483647, %v895
  %vm1487 = vcmp.eq.f32.partialorder %v1486, 8.507059e+37
  %v1488 = vand.u32 %v895, 2147483648
  %v1489 = vor.u32 1.1754944e-38, %v1488
  %v1490 = vsel %vm1487, %v1489, %v1485
  %v1491 = vmul.f32 1.0, %v1490
  %v1492 = vrcp.pop %v896
  %v1493 = vmul.f32 %v896, %v1492
  %v1494 = vsub.f32 1.0, %v1493
  %v1495 = vmul.f32 %v1492, %v1494
  %v1496 = vadd.f32 %v1492, %v1495
  %vm1497 = vweird.f32 %v896
  %vm1498 = vweird.f32 %v1492
  %vm1499 = vmor %vm1497, %vm1498
  %v1500 = vsel %vm1499, %v1492, %v1496
  %v1501 = vand.u32 2147483647, %v896
  %vm1502 = vcmp.eq.f32.partialorder %v1501, 8.507059e+37
  %v1503 = vand.u32 %v896, 2147483648
  %v1504 = vor.u32 1.1754944e-38, %v1503
  %v1505 = vsel %vm1502, %v1504, %v1500
  %v1506 = vmul.f32 1.0, %v1505
  %v1507 = vrcp.pop %v897
  %v1508 = vmul.f32 %v897, %v1507
  %v1509 = vsub.f32 1.0, %v1508
  %v1510 = vmul.f32 %v1507, %v1509
  %v1511 = vadd.f32 %v1507, %v1510
  %vm1512 = vweird.f32 %v897
  %vm1513 = vweird.f32 %v1507
  %vm1514 = vmor %vm1512, %vm1513
  %v1515 = vsel %vm1514, %v1507, %v1511
  %v1516 = vand.u32 2147483647, %v897
  %vm1517 = vcmp.eq.f32.partialorder %v1516, 8.507059e+37
  %v1518 = vand.u32 %v897, 2147483648
  %v1519 = vor.u32 1.1754944e-38, %v1518
  %v1520 = vsel %vm1517, %v1519, %v1515
  %v1521 = vmul.f32 1.0, %v1520
  %v1522 = vrcp.pop %v898
  %v1523 = vmul.f32 %v898, %v1522
  %v1524 = vsub.f32 1.0, %v1523
  %v1525 = vmul.f32 %v1522, %v1524
  %v1526 = vadd.f32 %v1522, %v1525
  %vm1527 = vweird.f32 %v898
  %vm1528 = vweird.f32 %v1522
  %vm1529 = vmor %vm1527, %vm1528
  %v1530 = vsel %vm1529, %v1522, %v1526
  %v1531 = vand.u32 2147483647, %v898
  %vm1532 = vcmp.eq.f32.partialorder %v1531, 8.507059e+37
  %v1533 = vand.u32 %v898, 2147483648
  %v1534 = vor.u32 1.1754944e-38, %v1533
  %v1535 = vsel %vm1532, %v1534, %v1530
  %v1536 = vmul.f32 1.0, %v1535
  %v1537 = vrcp.pop %v899
  %v1538 = vmul.f32 %v899, %v1537
  %v1539 = vsub.f32 1.0, %v1538
  %v1540 = vmul.f32 %v1537, %v1539
  %v1541 = vadd.f32 %v1537, %v1540
  %vm1542 = vweird.f32 %v899
  %vm1543 = vweird.f32 %v1537
  %vm1544 = vmor %vm1542, %vm1543
  %v1545 = vsel %vm1544, %v1537, %v1541
  %v1546 = vand.u32 2147483647, %v899
  %vm1547 = vcmp.eq.f32.partialorder %v1546, 8.507059e+37
  %v1548 = vand.u32 %v899, 2147483648
  %v1549 = vor.u32 1.1754944e-38, %v1548
  %v1550 = vsel %vm1547, %v1549, %v1545
  %v1551 = vmul.f32 1.0, %v1550
  %v1552 = vrcp.pop %v900
  %v1553 = vmul.f32 %v900, %v1552
  %v1554 = vsub.f32 1.0, %v1553
  %v1555 = vmul.f32 %v1552, %v1554
  %v1556 = vadd.f32 %v1552, %v1555
  %vm1557 = vweird.f32 %v900
  %vm1558 = vweird.f32 %v1552
  %vm1559 = vmor %vm1557, %vm1558
  %v1560 = vsel %vm1559, %v1552, %v1556
  %v1561 = vand.u32 2147483647, %v900
  %vm1562 = vcmp.eq.f32.partialorder %v1561, 8.507059e+37
  %v1563 = vand.u32 %v900, 2147483648
  %v1564 = vor.u32 1.1754944e-38, %v1563
  %v1565 = vsel %vm1562, %v1564, %v1560
  %v1566 = vmul.f32 1.0, %v1565
  %v1567 = vrcp.pop %v901
  %v1568 = vmul.f32 %v901, %v1567
  %v1569 = vsub.f32 1.0, %v1568
  %v1570 = vmul.f32 %v1567, %v1569
  %v1571 = vadd.f32 %v1567, %v1570
  %vm1572 = vweird.f32 %v901
  %vm1573 = vweird.f32 %v1567
  %vm1574 = vmor %vm1572, %vm1573
  %v1575 = vsel %vm1574, %v1567, %v1571
  %v1576 = vand.u32 2147483647, %v901
  %vm1577 = vcmp.eq.f32.partialorder %v1576, 8.507059e+37
  %v1578 = vand.u32 %v901, 2147483648
  %v1579 = vor.u32 1.1754944e-38, %v1578
  %v1580 = vsel %vm1577, %v1579, %v1575
  %v1581 = vmul.f32 1.0, %v1580
  %v1582 = vrcp.pop %v902
  %v1583 = vmul.f32 %v902, %v1582
  %v1584 = vsub.f32 1.0, %v1583
  %v1585 = vmul.f32 %v1582, %v1584
  %v1586 = vadd.f32 %v1582, %v1585
  %vm1587 = vweird.f32 %v902
  %vm1588 = vweird.f32 %v1582
  %vm1589 = vmor %vm1587, %vm1588
  %v1590 = vsel %vm1589, %v1582, %v1586
  %v1591 = vand.u32 2147483647, %v902
  %vm1592 = vcmp.eq.f32.partialorder %v1591, 8.507059e+37
  %v1593 = vand.u32 %v902, 2147483648
  %v1594 = vor.u32 1.1754944e-38, %v1593
  %v1595 = vsel %vm1592, %v1594, %v1590
  %v1596 = vmul.f32 1.0, %v1595
  %v1597 = vrcp.pop %v903
  %v1598 = vmul.f32 %v903, %v1597
  %v1599 = vsub.f32 1.0, %v1598
  %v1600 = vmul.f32 %v1597, %v1599
  %v1601 = vadd.f32 %v1597, %v1600
  %vm1602 = vweird.f32 %v903
  %vm1603 = vweird.f32 %v1597
  %vm1604 = vmor %vm1602, %vm1603
  %v1605 = vsel %vm1604, %v1597, %v1601
  %v1606 = vand.u32 2147483647, %v903
  %vm1607 = vcmp.eq.f32.partialorder %v1606, 8.507059e+37
  %v1608 = vand.u32 %v903, 2147483648
  %v1609 = vor.u32 1.1754944e-38, %v1608
  %v1610 = vsel %vm1607, %v1609, %v1605
  %v1611 = vmul.f32 1.0, %v1610
  %v1612 = vrcp.pop %v904
  %v1613 = vmul.f32 %v904, %v1612
  %v1614 = vsub.f32 1.0, %v1613
  %v1615 = vmul.f32 %v1612, %v1614
  %v1616 = vadd.f32 %v1612, %v1615
  %vm1617 = vweird.f32 %v904
  %vm1618 = vweird.f32 %v1612
  %vm1619 = vmor %vm1617, %vm1618
  %v1620 = vsel %vm1619, %v1612, %v1616
  %v1621 = vand.u32 2147483647, %v904
  %vm1622 = vcmp.eq.f32.partialorder %v1621, 8.507059e+37
  %v1623 = vand.u32 %v904, 2147483648
  %v1624 = vor.u32 1.1754944e-38, %v1623
  %v1625 = vsel %vm1622, %v1624, %v1620
  %v1626 = vmul.f32 1.0, %v1625
  %v1627 = vrcp.pop %v905
  %v1628 = vmul.f32 %v905, %v1627
  %v1629 = vsub.f32 1.0, %v1628
  %v1630 = vmul.f32 %v1627, %v1629
  %v1631 = vadd.f32 %v1627, %v1630
  %vm1632 = vweird.f32 %v905
  %vm1633 = vweird.f32 %v1627
  %vm1634 = vmor %vm1632, %vm1633
  %v1635 = vsel %vm1634, %v1627, %v1631
  %v1636 = vand.u32 2147483647, %v905
  %vm1637 = vcmp.eq.f32.partialorder %v1636, 8.507059e+37
  %v1638 = vand.u32 %v905, 2147483648
  %v1639 = vor.u32 1.1754944e-38, %v1638
  %v1640 = vsel %vm1637, %v1639, %v1635
  %v1641 = vmul.f32 1.0, %v1640
  %v1642 = vrcp.pop %v906
  %v1643 = vmul.f32 %v906, %v1642
  %v1644 = vsub.f32 1.0, %v1643
  %v1645 = vmul.f32 %v1642, %v1644
  %v1646 = vadd.f32 %v1642, %v1645
  %vm1647 = vweird.f32 %v906
  %vm1648 = vweird.f32 %v1642
  %vm1649 = vmor %vm1647, %vm1648
  %v1650 = vsel %vm1649, %v1642, %v1646
  %v1651 = vand.u32 2147483647, %v906
  %vm1652 = vcmp.eq.f32.partialorder %v1651, 8.507059e+37
  %v1653 = vand.u32 %v906, 2147483648
  %v1654 = vor.u32 1.1754944e-38, %v1653
  %v1655 = vsel %vm1652, %v1654, %v1650
  %v1656 = vmul.f32 1.0, %v1655
  %v1657 = vrcp.pop %v907
  %v1658 = vmul.f32 %v907, %v1657
  %v1659 = vsub.f32 1.0, %v1658
  %v1660 = vmul.f32 %v1657, %v1659
  %v1661 = vadd.f32 %v1657, %v1660
  %vm1662 = vweird.f32 %v907
  %vm1663 = vweird.f32 %v1657
  %vm1664 = vmor %vm1662, %vm1663
  %v1665 = vsel %vm1664, %v1657, %v1661
  %v1666 = vand.u32 2147483647, %v907
  %vm1667 = vcmp.eq.f32.partialorder %v1666, 8.507059e+37
  %v1668 = vand.u32 %v907, 2147483648
  %v1669 = vor.u32 1.1754944e-38, %v1668
  %v1670 = vsel %vm1667, %v1669, %v1665
  %v1671 = vmul.f32 1.0, %v1670
  %v1672 = vrcp.pop %v908
  %v1673 = vmul.f32 %v908, %v1672
  %v1674 = vsub.f32 1.0, %v1673
  %v1675 = vmul.f32 %v1672, %v1674
  %v1676 = vadd.f32 %v1672, %v1675
  %vm1677 = vweird.f32 %v908
  %vm1678 = vweird.f32 %v1672
  %vm1679 = vmor %vm1677, %vm1678
  %v1680 = vsel %vm1679, %v1672, %v1676
  %v1681 = vand.u32 2147483647, %v908
  %vm1682 = vcmp.eq.f32.partialorder %v1681, 8.507059e+37
  %v1683 = vand.u32 %v908, 2147483648
  %v1684 = vor.u32 1.1754944e-38, %v1683
  %v1685 = vsel %vm1682, %v1684, %v1680
  %v1686 = vmul.f32 1.0, %v1685
  %v1687 = vrcp.pop %v909
  %v1688 = vmul.f32 %v909, %v1687
  %v1689 = vsub.f32 1.0, %v1688
  %v1690 = vmul.f32 %v1687, %v1689
  %v1691 = vadd.f32 %v1687, %v1690
  %vm1692 = vweird.f32 %v909
  %vm1693 = vweird.f32 %v1687
  %vm1694 = vmor %vm1692, %vm1693
  %v1695 = vsel %vm1694, %v1687, %v1691
  %v1696 = vand.u32 2147483647, %v909
  %vm1697 = vcmp.eq.f32.partialorder %v1696, 8.507059e+37
  %v1698 = vand.u32 %v909, 2147483648
  %v1699 = vor.u32 1.1754944e-38, %v1698
  %v1700 = vsel %vm1697, %v1699, %v1695
  %v1701 = vmul.f32 1.0, %v1700
  %v1702 = vrcp.pop %v910
  %v1703 = vmul.f32 %v910, %v1702
  %v1704 = vsub.f32 1.0, %v1703
  %v1705 = vmul.f32 %v1702, %v1704
  %v1706 = vadd.f32 %v1702, %v1705
  %vm1707 = vweird.f32 %v910
  %vm1708 = vweird.f32 %v1702
  %vm1709 = vmor %vm1707, %vm1708
  %v1710 = vsel %vm1709, %v1702, %v1706
  %v1711 = vand.u32 2147483647, %v910
  %vm1712 = vcmp.eq.f32.partialorder %v1711, 8.507059e+37
  %v1713 = vand.u32 %v910, 2147483648
  %v1714 = vor.u32 1.1754944e-38, %v1713
  %v1715 = vsel %vm1712, %v1714, %v1710
  %v1716 = vmul.f32 1.0, %v1715
  %v1717 = vrcp.pop %v911
  %v1718 = vmul.f32 %v911, %v1717
  %v1719 = vsub.f32 1.0, %v1718
  %v1720 = vmul.f32 %v1717, %v1719
  %v1721 = vadd.f32 %v1717, %v1720
  %vm1722 = vweird.f32 %v911
  %vm1723 = vweird.f32 %v1717
  %vm1724 = vmor %vm1722, %vm1723
  %v1725 = vsel %vm1724, %v1717, %v1721
  %v1726 = vand.u32 2147483647, %v911
  %vm1727 = vcmp.eq.f32.partialorder %v1726, 8.507059e+37
  %v1728 = vand.u32 %v911, 2147483648
  %v1729 = vor.u32 1.1754944e-38, %v1728
  %v1730 = vsel %vm1727, %v1729, %v1725
  %v1731 = vmul.f32 1.0, %v1730
  %v1732 = vrcp.pop %v912
  %v1733 = vmul.f32 %v912, %v1732
  %v1734 = vsub.f32 1.0, %v1733
  %v1735 = vmul.f32 %v1732, %v1734
  %v1736 = vadd.f32 %v1732, %v1735
  %vm1737 = vweird.f32 %v912
  %vm1738 = vweird.f32 %v1732
  %vm1739 = vmor %vm1737, %vm1738
  %v1740 = vsel %vm1739, %v1732, %v1736
  %v1741 = vand.u32 2147483647, %v912
  %vm1742 = vcmp.eq.f32.partialorder %v1741, 8.507059e+37
  %v1743 = vand.u32 %v912, 2147483648
  %v1744 = vor.u32 1.1754944e-38, %v1743
  %v1745 = vsel %vm1742, %v1744, %v1740
  %v1746 = vmul.f32 1.0, %v1745
  %v1747 = vrcp.pop %v913
  %v1748 = vmul.f32 %v913, %v1747
  %v1749 = vsub.f32 1.0, %v1748
  %v1750 = vmul.f32 %v1747, %v1749
  %v1751 = vadd.f32 %v1747, %v1750
  %vm1752 = vweird.f32 %v913
  %vm1753 = vweird.f32 %v1747
  %vm1754 = vmor %vm1752, %vm1753
  %v1755 = vsel %vm1754, %v1747, %v1751
  %v1756 = vand.u32 2147483647, %v913
  %vm1757 = vcmp.eq.f32.partialorder %v1756, 8.507059e+37
  %v1758 = vand.u32 %v913, 2147483648
  %v1759 = vor.u32 1.1754944e-38, %v1758
  %v1760 = vsel %vm1757, %v1759, %v1755
  %v1761 = vmul.f32 1.0, %v1760
  %v1762 = vrcp.pop %v914
  %v1763 = vmul.f32 %v914, %v1762
  %v1764 = vsub.f32 1.0, %v1763
  %v1765 = vmul.f32 %v1762, %v1764
  %v1766 = vadd.f32 %v1762, %v1765
  %vm1767 = vweird.f32 %v914
  %vm1768 = vweird.f32 %v1762
  %vm1769 = vmor %vm1767, %vm1768
  %v1770 = vsel %vm1769, %v1762, %v1766
  %v1771 = vand.u32 2147483647, %v914
  %vm1772 = vcmp.eq.f32.partialorder %v1771, 8.507059e+37
  %v1773 = vand.u32 %v914, 2147483648
  %v1774 = vor.u32 1.1754944e-38, %v1773
  %v1775 = vsel %vm1772, %v1774, %v1770
  %v1776 = vmul.f32 1.0, %v1775
  %v1777 = vrcp.pop %v915
  %v1778 = vmul.f32 %v915, %v1777
  %v1779 = vsub.f32 1.0, %v1778
  %v1780 = vmul.f32 %v1777, %v1779
  %v1781 = vadd.f32 %v1777, %v1780
  %vm1782 = vweird.f32 %v915
  %vm1783 = vweird.f32 %v1777
  %vm1784 = vmor %vm1782, %vm1783
  %v1785 = vsel %vm1784, %v1777, %v1781
  %v1786 = vand.u32 2147483647, %v915
  %vm1787 = vcmp.eq.f32.partialorder %v1786, 8.507059e+37
  %v1788 = vand.u32 %v915, 2147483648
  %v1789 = vor.u32 1.1754944e-38, %v1788
  %v1790 = vsel %vm1787, %v1789, %v1785
  %v1791 = vmul.f32 1.0, %v1790
  %v1792 = vrcp.pop %v916
  %v1793 = vmul.f32 %v916, %v1792
  %v1794 = vsub.f32 1.0, %v1793
  %v1795 = vmul.f32 %v1792, %v1794
  %v1796 = vadd.f32 %v1792, %v1795
  %vm1797 = vweird.f32 %v916
  %vm1798 = vweird.f32 %v1792
  %vm1799 = vmor %vm1797, %vm1798
  %v1800 = vsel %vm1799, %v1792, %v1796
  %v1801 = vand.u32 2147483647, %v916
  %vm1802 = vcmp.eq.f32.partialorder %v1801, 8.507059e+37
  %v1803 = vand.u32 %v916, 2147483648
  %v1804 = vor.u32 1.1754944e-38, %v1803
  %v1805 = vsel %vm1802, %v1804, %v1800
  %v1806 = vmul.f32 1.0, %v1805
  %v1807 = vrcp.pop %v917
  %v1808 = vmul.f32 %v917, %v1807
  %v1809 = vsub.f32 1.0, %v1808
  %v1810 = vmul.f32 %v1807, %v1809
  %v1811 = vadd.f32 %v1807, %v1810
  %vm1812 = vweird.f32 %v917
  %vm1813 = vweird.f32 %v1807
  %vm1814 = vmor %vm1812, %vm1813
  %v1815 = vsel %vm1814, %v1807, %v1811
  %v1816 = vand.u32 2147483647, %v917
  %vm1817 = vcmp.eq.f32.partialorder %v1816, 8.507059e+37
  %v1818 = vand.u32 %v917, 2147483648
  %v1819 = vor.u32 1.1754944e-38, %v1818
  %v1820 = vsel %vm1817, %v1819, %v1815
  %v1821 = vmul.f32 1.0, %v1820
  %v1822 = vrcp.pop %v918
  %v1823 = vmul.f32 %v918, %v1822
  %v1824 = vsub.f32 1.0, %v1823
  %v1825 = vmul.f32 %v1822, %v1824
  %v1826 = vadd.f32 %v1822, %v1825
  %vm1827 = vweird.f32 %v918
  %vm1828 = vweird.f32 %v1822
  %vm1829 = vmor %vm1827, %vm1828
  %v1830 = vsel %vm1829, %v1822, %v1826
  %v1831 = vand.u32 2147483647, %v918
  %vm1832 = vcmp.eq.f32.partialorder %v1831, 8.507059e+37
  %v1833 = vand.u32 %v918, 2147483648
  %v1834 = vor.u32 1.1754944e-38, %v1833
  %v1835 = vsel %vm1832, %v1834, %v1830
  %v1836 = vmul.f32 1.0, %v1835
  %v1837 = vrcp.pop %v919
  %v1838 = vmul.f32 %v919, %v1837
  %v1839 = vsub.f32 1.0, %v1838
  %v1840 = vmul.f32 %v1837, %v1839
  %v1841 = vadd.f32 %v1837, %v1840
  %vm1842 = vweird.f32 %v919
  %vm1843 = vweird.f32 %v1837
  %vm1844 = vmor %vm1842, %vm1843
  %v1845 = vsel %vm1844, %v1837, %v1841
  %v1846 = vand.u32 2147483647, %v919
  %vm1847 = vcmp.eq.f32.partialorder %v1846, 8.507059e+37
  %v1848 = vand.u32 %v919, 2147483648
  %v1849 = vor.u32 1.1754944e-38, %v1848
  %v1850 = vsel %vm1847, %v1849, %v1845
  %v1851 = vmul.f32 1.0, %v1850
  %v1852 = vrcp.pop %v920
  %v1853 = vmul.f32 %v920, %v1852
  %v1854 = vsub.f32 1.0, %v1853
  %v1855 = vmul.f32 %v1852, %v1854
  %v1856 = vadd.f32 %v1852, %v1855
  %vm1857 = vweird.f32 %v920
  %vm1858 = vweird.f32 %v1852
  %vm1859 = vmor %vm1857, %vm1858
  %v1860 = vsel %vm1859, %v1852, %v1856
  %v1861 = vand.u32 2147483647, %v920
  %vm1862 = vcmp.eq.f32.partialorder %v1861, 8.507059e+37
  %v1863 = vand.u32 %v920, 2147483648
  %v1864 = vor.u32 1.1754944e-38, %v1863
  %v1865 = vsel %vm1862, %v1864, %v1860
  %v1866 = vmul.f32 1.0, %v1865
  %v1867 = vrcp.pop %v921
  %v1868 = vmul.f32 %v921, %v1867
  %v1869 = vsub.f32 1.0, %v1868
  %v1870 = vmul.f32 %v1867, %v1869
  %v1871 = vadd.f32 %v1867, %v1870
  %vm1872 = vweird.f32 %v921
  %vm1873 = vweird.f32 %v1867
  %vm1874 = vmor %vm1872, %vm1873
  %v1875 = vsel %vm1874, %v1867, %v1871
  %v1876 = vand.u32 2147483647, %v921
  %vm1877 = vcmp.eq.f32.partialorder %v1876, 8.507059e+37
  %v1878 = vand.u32 %v921, 2147483648
  %v1879 = vor.u32 1.1754944e-38, %v1878
  %v1880 = vsel %vm1877, %v1879, %v1875
  %v1881 = vmul.f32 1.0, %v1880
  %v1882 = vmul.f32 %v602, %v936
  %v1883 = vmul.f32 %v603, %v951
  %v1884 = vmul.f32 %v604, %v966
  %v1885 = vmul.f32 %v605, %v981
  %v1886 = vmul.f32 %v606, %v996
  %v1887 = vmul.f32 %v607, %v1011
  %v1888 = vmul.f32 %v608, %v1026
  %v1889 = vmul.f32 %v609, %v1041
  %v1890 = vmul.f32 %v610, %v1056
  %v1891 = vmul.f32 %v611, %v1071
  %v1892 = vmul.f32 %v612, %v1086
  %v1893 = vmul.f32 %v613, %v1101
  %v1894 = vmul.f32 %v614, %v1116
  %v1895 = vmul.f32 %v615, %v1131
  %v1896 = vmul.f32 %v616, %v1146
  %v1897 = vmul.f32 %v617, %v1161
  %v1898 = vmul.f32 %v618, %v1176
  %v1899 = vmul.f32 %v619, %v1191
  %v1900 = vmul.f32 %v620, %v1206
  %v1901 = vmul.f32 %v621, %v1221
  %v1902 = vmul.f32 %v622, %v1236
  %v1903 = vmul.f32 %v623, %v1251
  %v1904 = vmul.f32 %v624, %v1266
  %v1905 = vmul.f32 %v625, %v1281
  %v1906 = vmul.f32 %v626, %v1296
  %v1907 = vmul.f32 %v627, %v1311
  %v1908 = vmul.f32 %v628, %v1326
  %v1909 = vmul.f32 %v629, %v1341
  %v1910 = vmul.f32 %v630, %v1356
  %v1911 = vmul.f32 %v631, %v1371
  %v1912 = vmul.f32 %v632, %v1386
  %v1913 = vmul.f32 %v633, %v1401
  %v1914 = vmul.f32 %v634, %v1416
  %v1915 = vmul.f32 %v635, %v1431
  %v1916 = vmul.f32 %v636, %v1446
  %v1917 = vmul.f32 %v637, %v1461
  %v1918 = vmul.f32 %v638, %v1476
  %v1919 = vmul.f32 %v639, %v1491
  %v1920 = vmul.f32 %v640, %v1506
  %v1921 = vmul.f32 %v641, %v1521
  %v1922 = vmul.f32 %v642, %v1536
  %v1923 = vmul.f32 %v643, %v1551
  %v1924 = vmul.f32 %v644, %v1566
  %v1925 = vmul.f32 %v645, %v1581
  %v1926 = vmul.f32 %v646, %v1596
  %v1927 = vmul.f32 %v647, %v1611
  %v1928 = vmul.f32 %v648, %v1626
  %v1929 = vmul.f32 %v649, %v1641
  %v1930 = vmul.f32 %v650, %v1656
  %v1931 = vmul.f32 %v651, %v1671
  %v1932 = vmul.f32 %v652, %v1686
  %v1933 = vmul.f32 %v653, %v1701
  %v1934 = vmul.f32 %v654, %v1716
  %v1935 = vmul.f32 %v655, %v1731
  %v1936 = vmul.f32 %v656, %v1746
  %v1937 = vmul.f32 %v657, %v1761
  %v1938 = vmul.f32 %v658, %v1776
  %v1939 = vmul.f32 %v659, %v1791
  %v1940 = vmul.f32 %v660, %v1806
  %v1941 = vmul.f32 %v661, %v1821
  %v1942 = vmul.f32 %v662, %v1836
  %v1943 = vmul.f32 %v663, %v1851
  %v1944 = vmul.f32 %v664, %v1866
  %v1945 = vmul.f32 %v665, %v1881
  %v1946 = vpack.c.bf16 %v1882, %v1882
  %v1947 = vpack.c.bf16 %v1883, %v1883
  %v1948 = vpack.c.bf16 %v1884, %v1884
  %v1949 = vpack.c.bf16 %v1885, %v1885
  %v1950 = vpack.c.bf16 %v1886, %v1886
  %v1951 = vpack.c.bf16 %v1887, %v1887
  %v1952 = vpack.c.bf16 %v1888, %v1888
  %v1953 = vpack.c.bf16 %v1889, %v1889
  %v1954 = vpack.c.bf16 %v1890, %v1890
  %v1955 = vpack.c.bf16 %v1891, %v1891
  %v1956 = vpack.c.bf16 %v1892, %v1892
  %v1957 = vpack.c.bf16 %v1893, %v1893
  %v1958 = vpack.c.bf16 %v1894, %v1894
  %v1959 = vpack.c.bf16 %v1895, %v1895
  %v1960 = vpack.c.bf16 %v1896, %v1896
  %v1961 = vpack.c.bf16 %v1897, %v1897
  %v1962 = vpack.c.bf16 %v1898, %v1898
  %v1963 = vpack.c.bf16 %v1899, %v1899
  %v1964 = vpack.c.bf16 %v1900, %v1900
  %v1965 = vpack.c.bf16 %v1901, %v1901
  %v1966 = vpack.c.bf16 %v1902, %v1902
  %v1967 = vpack.c.bf16 %v1903, %v1903
  %v1968 = vpack.c.bf16 %v1904, %v1904
  %v1969 = vpack.c.bf16 %v1905, %v1905
  %v1970 = vpack.c.bf16 %v1906, %v1906
  %v1971 = vpack.c.bf16 %v1907, %v1907
  %v1972 = vpack.c.bf16 %v1908, %v1908
  %v1973 = vpack.c.bf16 %v1909, %v1909
  %v1974 = vpack.c.bf16 %v1910, %v1910
  %v1975 = vpack.c.bf16 %v1911, %v1911
  %v1976 = vpack.c.bf16 %v1912, %v1912
  %v1977 = vpack.c.bf16 %v1913, %v1913
  %v1978 = vpack.c.bf16 %v1914, %v1914
  %v1979 = vpack.c.bf16 %v1915, %v1915
  %v1980 = vpack.c.bf16 %v1916, %v1916
  %v1981 = vpack.c.bf16 %v1917, %v1917
  %v1982 = vpack.c.bf16 %v1918, %v1918
  %v1983 = vpack.c.bf16 %v1919, %v1919
  %v1984 = vpack.c.bf16 %v1920, %v1920
  %v1985 = vpack.c.bf16 %v1921, %v1921
  %v1986 = vpack.c.bf16 %v1922, %v1922
  %v1987 = vpack.c.bf16 %v1923, %v1923
  %v1988 = vpack.c.bf16 %v1924, %v1924
  %v1989 = vpack.c.bf16 %v1925, %v1925
  %v1990 = vpack.c.bf16 %v1926, %v1926
  %v1991 = vpack.c.bf16 %v1927, %v1927
  %v1992 = vpack.c.bf16 %v1928, %v1928
  %v1993 = vpack.c.bf16 %v1929, %v1929
  %v1994 = vpack.c.bf16 %v1930, %v1930
  %v1995 = vpack.c.bf16 %v1931, %v1931
  %v1996 = vpack.c.bf16 %v1932, %v1932
  %v1997 = vpack.c.bf16 %v1933, %v1933
  %v1998 = vpack.c.bf16 %v1934, %v1934
  %v1999 = vpack.c.bf16 %v1935, %v1935
  %v2000 = vpack.c.bf16 %v1936, %v1936
  %v2001 = vpack.c.bf16 %v1937, %v1937
  %v2002 = vpack.c.bf16 %v1938, %v1938
  %v2003 = vpack.c.bf16 %v1939, %v1939
  %v2004 = vpack.c.bf16 %v1940, %v1940
  %v2005 = vpack.c.bf16 %v1941, %v1941
  %v2006 = vpack.c.bf16 %v1942, %v1942
  %v2007 = vpack.c.bf16 %v1943, %v1943
  %v2008 = vpack.c.bf16 %v1944, %v1944
  %v2009 = vpack.c.bf16 %v1945, %v1945
  %vm2010 = vcmask 257024
  %2011 = vst.msk [vmem:[%s4] sm:$0xf] %vm2010, %v1946
  %2012 = vst.msk [vmem:[%s4 + $0x4] sm:$0xf] %vm2010, %v1947
  %2013 = vst.msk [vmem:[%s4 + $0x8] sm:$0xf] %vm2010, %v1948
  %2014 = vst.msk [vmem:[%s4 + $0xc] sm:$0xf] %vm2010, %v1949
  %2015 = vst.msk [vmem:[%s4 + $0x10] sm:$0xf] %vm2010, %v1950
  %2016 = vst.msk [vmem:[%s4 + $0x14] sm:$0xf] %vm2010, %v1951
  %2017 = vst.msk [vmem:[%s4 + $0x18] sm:$0xf] %vm2010, %v1952
  %2018 = vst.msk [vmem:[%s4 + $0x1c] sm:$0xf] %vm2010, %v1953
  %2019 = vst.msk [vmem:[%s4 + $0x20] sm:$0xf] %vm2010, %v1954
  %2020 = vst.msk [vmem:[%s4 + $0x24] sm:$0xf] %vm2010, %v1955
  %2021 = vst.msk [vmem:[%s4 + $0x28] sm:$0xf] %vm2010, %v1956
  %2022 = vst.msk [vmem:[%s4 + $0x2c] sm:$0xf] %vm2010, %v1957
  %2023 = vst.msk [vmem:[%s4 + $0x30] sm:$0xf] %vm2010, %v1958
  %2024 = vst.msk [vmem:[%s4 + $0x34] sm:$0xf] %vm2010, %v1959
  %2025 = vst.msk [vmem:[%s4 + $0x38] sm:$0xf] %vm2010, %v1960
  %2026 = vst.msk [vmem:[%s4 + $0x3c] sm:$0xf] %vm2010, %v1961
  %2027 = vst.msk [vmem:[%s4 + $0x40] sm:$0xf] %vm2010, %v1962
  %2028 = vst.msk [vmem:[%s4 + $0x44] sm:$0xf] %vm2010, %v1963
  %2029 = vst.msk [vmem:[%s4 + $0x48] sm:$0xf] %vm2010, %v1964
  %2030 = vst.msk [vmem:[%s4 + $0x4c] sm:$0xf] %vm2010, %v1965
  %2031 = vst.msk [vmem:[%s4 + $0x50] sm:$0xf] %vm2010, %v1966
  %2032 = vst.msk [vmem:[%s4 + $0x54] sm:$0xf] %vm2010, %v1967
  %2033 = vst.msk [vmem:[%s4 + $0x58] sm:$0xf] %vm2010, %v1968
  %2034 = vst.msk [vmem:[%s4 + $0x5c] sm:$0xf] %vm2010, %v1969
  %2035 = vst.msk [vmem:[%s4 + $0x60] sm:$0xf] %vm2010, %v1970
  %2036 = vst.msk [vmem:[%s4 + $0x64] sm:$0xf] %vm2010, %v1971
  %2037 = vst.msk [vmem:[%s4 + $0x68] sm:$0xf] %vm2010, %v1972
  %2038 = vst.msk [vmem:[%s4 + $0x6c] sm:$0xf] %vm2010, %v1973
  %2039 = vst.msk [vmem:[%s4 + $0x70] sm:$0xf] %vm2010, %v1974
  %2040 = vst.msk [vmem:[%s4 + $0x74] sm:$0xf] %vm2010, %v1975
  %2041 = vst.msk [vmem:[%s4 + $0x78] sm:$0xf] %vm2010, %v1976
  %2042 = vst.msk [vmem:[%s4 + $0x7c] sm:$0xf] %vm2010, %v1977
  %2043 = vst.msk [vmem:[%s4 + $0x80] sm:$0xf] %vm2010, %v1978
  %2044 = vst.msk [vmem:[%s4 + $0x84] sm:$0xf] %vm2010, %v1979
  %2045 = vst.msk [vmem:[%s4 + $0x88] sm:$0xf] %vm2010, %v1980
  %2046 = vst.msk [vmem:[%s4 + $0x8c] sm:$0xf] %vm2010, %v1981
  %2047 = vst.msk [vmem:[%s4 + $0x90] sm:$0xf] %vm2010, %v1982
  %2048 = vst.msk [vmem:[%s4 + $0x94] sm:$0xf] %vm2010, %v1983
  %2049 = vst.msk [vmem:[%s4 + $0x98] sm:$0xf] %vm2010, %v1984
  %2050 = vst.msk [vmem:[%s4 + $0x9c] sm:$0xf] %vm2010, %v1985
  %2051 = vst.msk [vmem:[%s4 + $0xa0] sm:$0xf] %vm2010, %v1986
  %2052 = vst.msk [vmem:[%s4 + $0xa4] sm:$0xf] %vm2010, %v1987
  %2053 = vst.msk [vmem:[%s4 + $0xa8] sm:$0xf] %vm2010, %v1988
  %2054 = vst.msk [vmem:[%s4 + $0xac] sm:$0xf] %vm2010, %v1989
  %2055 = vst.msk [vmem:[%s4 + $0xb0] sm:$0xf] %vm2010, %v1990
  %2056 = vst.msk [vmem:[%s4 + $0xb4] sm:$0xf] %vm2010, %v1991
  %2057 = vst.msk [vmem:[%s4 + $0xb8] sm:$0xf] %vm2010, %v1992
  %2058 = vst.msk [vmem:[%s4 + $0xbc] sm:$0xf] %vm2010, %v1993
  %2059 = vst.msk [vmem:[%s4 + $0xc0] sm:$0xf] %vm2010, %v1994
  %2060 = vst.msk [vmem:[%s4 + $0xc4] sm:$0xf] %vm2010, %v1995
  %2061 = vst.msk [vmem:[%s4 + $0xc8] sm:$0xf] %vm2010, %v1996
  %2062 = vst.msk [vmem:[%s4 + $0xcc] sm:$0xf] %vm2010, %v1997
  %2063 = vst.msk [vmem:[%s4 + $0xd0] sm:$0xf] %vm2010, %v1998
  %2064 = vst.msk [vmem:[%s4 + $0xd4] sm:$0xf] %vm2010, %v1999
  %2065 = vst.msk [vmem:[%s4 + $0xd8] sm:$0xf] %vm2010, %v2000
  %2066 = vst.msk [vmem:[%s4 + $0xdc] sm:$0xf] %vm2010, %v2001
  %2067 = vst.msk [vmem:[%s4 + $0xe0] sm:$0xf] %vm2010, %v2002
  %2068 = vst.msk [vmem:[%s4 + $0xe4] sm:$0xf] %vm2010, %v2003
  %2069 = vst.msk [vmem:[%s4 + $0xe8] sm:$0xf] %vm2010, %v2004
  %2070 = vst.msk [vmem:[%s4 + $0xec] sm:$0xf] %vm2010, %v2005
  %2071 = vst.msk [vmem:[%s4 + $0xf0] sm:$0xf] %vm2010, %v2006
  %2072 = vst.msk [vmem:[%s4 + $0xf4] sm:$0xf] %vm2010, %v2007
  %2073 = vst.msk [vmem:[%s4 + $0xf8] sm:$0xf] %vm2010, %v2008
  %2074 = vst.msk [vmem:[%s4 + $0xfc] sm:$0xf] %vm2010, %v2009
  // Predicated region
  $region18: #{tpu_custom_call.1} parent=0 // pred_check
    _
  $region19: #{tpu_custom_call.1} parent=0 // pred_check_branch
    %2076 = sbr.rel (0) target = $region21
  $region20: #{tpu_custom_call.1} parent=0 // pred_region
    _
  $region21: #{tpu_custom_call.1} parent=0 // pred_fallthru
    _
  // Predicated region
  $region22: #{tpu_custom_call.1} parent=0 // pred_check
    _
  $region23: #{tpu_custom_call.1} parent=0 // pred_check_branch
    %2078 = sbr.rel (0) target = $region25
  $region24: #{tpu_custom_call.1} parent=0 // pred_region
    _
  $region25: #{tpu_custom_call.1} parent=0 // pred_fallthru
    _

</llo_original>
